<compile_context>
chip_gen: v6e
topology: v6e:2x2x1
jax: 0.10.0
libtpu: 0.0.40
codegen_flags: <defaults>
</compile_context>

<pallas_src>
import jax
import jax.numpy as jnp
from jax.experimental import pallas as pl
from jax.experimental.pallas import tpu as pltpu

LOOKBACK = 10    # T
IN_FEAT = 1      # F
HIDDEN = 50      # LSTM units
OUT_FEAT = 1     # Dense(1)
H_PAD = 128      # contraction / gate-block width (lane tile)
GATE_W = 4 * H_PAD   # 512: gate g occupies lanes [128*g, 128*g + 50)


def lstm_dense_kernel(x_ref, wk_ref, wr_ref, b_ref, wdt_ref, bd_ref,
                      out_ref, xproj_scr):
    """Fused Keras LSTM(50, relu, return_sequences=True) + Dense(1).

    Refs:
      x_ref    : (T, B, 1)        input sequence, time-major, batch padded to 8k
      wk_ref   : (1, GATE_W)      fused input kernels  [i|f|c|o], gate-aligned
      wr_ref   : (H_PAD, GATE_W)  fused recurrent kernels, gate-aligned, 0-padded
      b_ref    : (1, GATE_W)      fused biases, gate-aligned, zero-padded
      wdt_ref  : (1, H_PAD)       dense kernel (transposed, lane-major, 0-padded)
      bd_ref   : (1, 1)           dense bias
      out_ref  : (T, B)           per-timestep dense output (time-major)
      xproj_scr: (T, B, GATE_W)   scratch: x @ Wk + b for all timesteps
    """
    T, B, _ = x_ref.shape
    HP = H_PAD

    # ---- Hoisted input projection + bias for ALL timesteps (VPU, one shot). --
    # F == 1, so x_t @ Wk is a broadcast multiply with a single row.
    # (T, B, 1) * (1, 1, GATE_W) + (1, 1, GATE_W) -> (T, B, GATE_W), stored to
    # VMEM so the unrolled recurrence only re-loads one contiguous tile per step.
    xproj_scr[...] = (x_ref[...] * wk_ref[...][None, :, :]
                      + b_ref[...][None, :, :])

    wr_all = wr_ref[...]                              # (H_PAD, GATE_W), once

    def gates(z):
        # Each slice is a full, lane-aligned 128-wide block (no rotations).
        i = jax.nn.sigmoid(z[:, 0 * HP:1 * HP])
        f = jax.nn.sigmoid(z[:, 1 * HP:2 * HP])
        g = jnp.maximum(z[:, 2 * HP:3 * HP], 0.0)     # activation='relu'
        o = jax.nn.sigmoid(z[:, 3 * HP:4 * HP])
        return i, f, g, o

    # ---- Peeled t = 0: h == 0, so skip the recurrent matmul entirely. -------
    z = xproj_scr[0]                                  # (B, GATE_W)
    i0, _, g0, o0 = gates(z)                          # f * c_prev == 0
    c = i0 * g0                                       # (B, H_PAD)
    h = o0 * jnp.maximum(c, 0.0)                      # relu on cell output
    hs = [h]

    # ---- Serial recurrence; h and c live in vregs (one vreg each). ----------
    for t in range(1, T):                             # static unroll (T = 10)
        # Single fused MXU matmul per step: (B, 128) @ (128, 512) -> (B, 512)
        z = xproj_scr[t] + jnp.dot(h, wr_all,
                                   preferred_element_type=jnp.float32)
        i, f, g, o = gates(z)
        c = f * c + i * g
        h = o * jnp.maximum(c, 0.0)
        hs.append(h)                                  # stays in vregs (10 total)

    # ---- Deferred Dense(1) over all timesteps at once (off critical path). --
    hs_all = jnp.stack(hs, axis=0)                    # (T, B, H_PAD)
    y = jnp.sum(hs_all * wdt_ref[...][None, :, :], axis=-1)   # (T, B)
    out_ref[...] = y + bd_ref[...]                    # single lane-dense store


def _fuse_gate_params(wk, wr, b):
    """Pad each gate block to 128 lanes and concatenate -> gate-aligned params.

    Zero-padding invariant: padded lanes (50..127 of each gate block) and padded
    contraction rows (50..127) stay exactly zero, so padded h/c lanes remain 0
    through the recurrence and the Dense readout ignores them.
    """
    pad_h = H_PAD - HIDDEN
    wk_blocks = [jnp.pad(wk[g], ((0, 0), (0, pad_h))) for g in range(4)]
    wr_blocks = [jnp.pad(wr[g], ((0, pad_h), (0, pad_h))) for g in range(4)]
    b_blocks = [jnp.pad(b[g], ((0, 0), (0, pad_h))) for g in range(4)]
    wk_all = jnp.concatenate(wk_blocks, axis=-1)      # (F, GATE_W)
    wr_all = jnp.concatenate(wr_blocks, axis=-1)      # (H_PAD, GATE_W)
    b_all = jnp.concatenate(b_blocks, axis=-1)        # (1, GATE_W)
    return wk_all, wr_all, b_all


def lstm_dense(x, wk, wr, b, wd, bd):
    B, T, _ = x.shape
    # Pad batch to the f32 sublane tile (8) so every vector op is unmasked.
    B_pad = max(8, ((B + 7) // 8) * 8)
    x_pad = jnp.pad(x, ((0, B_pad - B), (0, 0), (0, 0)))
    x_tb = jnp.transpose(x_pad, (1, 0, 2))            # (T, B_pad, 1) time-major

    wk_all, wr_all, b_all = _fuse_gate_params(wk, wr, b)
    wdt = jnp.pad(wd.T, ((0, 0), (0, H_PAD - HIDDEN)))   # (1, H_PAD)

    out_tb = pl.pallas_call(
        lstm_dense_kernel,
        out_shape=jax.ShapeDtypeStruct((T, B_pad), jnp.float32),
        in_specs=[pl.BlockSpec(memory_space=pltpu.MemorySpace.VMEM)] * 6,
        out_specs=pl.BlockSpec(memory_space=pltpu.MemorySpace.VMEM),
        scratch_shapes=[
            pltpu.VMEM((T, B_pad, GATE_W), jnp.float32),  # hoisted x-projection
        ],
        # TODO(synk): for non-toy batch sizes, add a batch grid with
        # dimension_semantics=("parallel",) so v7x's 2 TensorCores split rows.
    )(x_tb, wk_all, wr_all, b_all, wdt, bd)

    # (T, B_pad) -> (B, T, 1)
    return jnp.transpose(out_tb, (1, 0))[:B][..., None]


def reference(x, wk, wr, b, wd, bd):
    """Pure-JAX reference of the same Keras LSTM(relu) + Dense(1) semantics."""
    B, T, _ = x.shape
    h = jnp.zeros((B, HIDDEN), jnp.float32)
    c = jnp.zeros((B, HIDDEN), jnp.float32)
    outs = []
    for t in range(T):
        xt = x[:, t, :]
        z = [xt @ wk[g] + h @ wr[g] + b[g] for g in range(4)]
        i = jax.nn.sigmoid(z[0])
        f = jax.nn.sigmoid(z[1])
        g = jnp.maximum(z[2], 0.0)
        o = jax.nn.sigmoid(z[3])
        c = f * c + i * g
        h = o * jnp.maximum(c, 0.0)
        outs.append(h @ wd + bd)
    return jnp.stack(outs, axis=1)


if __name__ == "__main__":
    key = jax.random.PRNGKey(0)
    kx, k1, k2, k3, k4, k5 = jax.random.split(key, 6)

    B = 2
    x = jax.random.normal(kx, (B, LOOKBACK, IN_FEAT), dtype=jnp.float32)

    # Deterministic parameter init (synthetic weights, not a checkpoint).
    wk = 0.1 * jax.random.normal(k1, (4, IN_FEAT, HIDDEN), dtype=jnp.float32)
    wr = 0.1 * jax.random.normal(k2, (4, HIDDEN, HIDDEN), dtype=jnp.float32)
    b = 0.1 * jax.random.normal(k3, (4, 1, HIDDEN), dtype=jnp.float32)
    wd = 0.1 * jax.random.normal(k4, (HIDDEN, OUT_FEAT), dtype=jnp.float32)
    bd = 0.1 * jax.random.normal(k5, (1, OUT_FEAT), dtype=jnp.float32)

    out = lstm_dense(x, wk, wr, b, wd, bd)
    out = jax.block_until_ready(out)

    ref = reference(x, wk, wr, b, wd, bd)
    assert out.shape == (B, LOOKBACK, OUT_FEAT)
    assert jnp.allclose(out, ref, atol=1e-5, rtol=1e-5)

    print("KERNEL_OK")
</pallas_src>

<mosaic_0001>
module attributes {stable_mosaic.version = 11 : i64} {
  func.func @lstm_dense_kernel(%arg0: memref<10x8x1xf32, #tpu.memory_space<vmem>>, %arg1: memref<1x512xf32, #tpu.memory_space<vmem>>, %arg2: memref<128x512xf32, #tpu.memory_space<vmem>>, %arg3: memref<1x512xf32, #tpu.memory_space<vmem>>, %arg4: memref<1x128xf32, #tpu.memory_space<vmem>>, %arg5: memref<1x1xf32, #tpu.memory_space<vmem>>, %arg6: memref<10x8xf32, #tpu.memory_space<vmem>>, %arg7: memref<10x8x512xf32, #tpu.memory_space<vmem>>) attributes {dimension_semantics = [], scalar_prefetch = 0 : i64, scratch_operands = 1 : i64, tpu.core_type = #tpu.core_type<tc>} {
    %c0 = arith.constant 0 : index
    %c0_0 = arith.constant 0 : index
    %c0_1 = arith.constant 0 : index
    %0 = vector.load %arg0[%c0, %c0_0, %c0_1] : memref<10x8x1xf32, #tpu.memory_space<vmem>>, vector<10x8x1xf32>
    %c0_2 = arith.constant 0 : index
    %c0_3 = arith.constant 0 : index
    %1 = vector.load %arg1[%c0_2, %c0_3] : memref<1x512xf32, #tpu.memory_space<vmem>>, vector<1x512xf32>
    %2 = vector.shape_cast %1 : vector<1x512xf32> to vector<1x1x512xf32>
    %3 = vector.broadcast %0 : vector<10x8x1xf32> to vector<10x8x512xf32>
    %4 = vector.broadcast %2 : vector<1x1x512xf32> to vector<10x8x512xf32>
    %5 = arith.mulf %3, %4 : vector<10x8x512xf32>
    %c0_4 = arith.constant 0 : index
    %c0_5 = arith.constant 0 : index
    %6 = vector.load %arg3[%c0_4, %c0_5] : memref<1x512xf32, #tpu.memory_space<vmem>>, vector<1x512xf32>
    %7 = vector.shape_cast %6 : vector<1x512xf32> to vector<1x1x512xf32>
    %8 = vector.broadcast %7 : vector<1x1x512xf32> to vector<10x8x512xf32>
    %9 = arith.addf %5, %8 : vector<10x8x512xf32>
    %c0_6 = arith.constant 0 : index
    %c0_7 = arith.constant 0 : index
    %c0_8 = arith.constant 0 : index
    %10 = vector.load %arg7[%c0_6, %c0_7, %c0_8] : memref<10x8x512xf32, #tpu.memory_space<vmem>>, vector<10x8x512xf32>
    tpu.vector_store %arg7[%c0_6, %c0_7, %c0_8], %9 {strides = array<i32>} : memref<10x8x512xf32, #tpu.memory_space<vmem>>, vector<10x8x512xf32>,
    %c0_9 = arith.constant 0 : index
    %c0_10 = arith.constant 0 : index
    %11 = vector.load %arg2[%c0_9, %c0_10] : memref<128x512xf32, #tpu.memory_space<vmem>>, vector<128x512xf32>
    %c0_11 = arith.constant 0 : index
    %c0_12 = arith.constant 0 : index
    %c0_13 = arith.constant 0 : index
    %12 = vector.load %arg7[%c0_11, %c0_12, %c0_13] : memref<10x8x512xf32, #tpu.memory_space<vmem>>, vector<1x8x512xf32>
    %13 = vector.shape_cast %12 : vector<1x8x512xf32> to vector<8x512xf32>
    %14 = vector.extract_strided_slice %13 {offsets = [0, 0], sizes = [8, 128], strides = [1, 1]} : vector<8x512xf32> to vector<8x128xf32>
    %15 = arith.negf %14 : vector<8x128xf32>
    %16 = math.exp %15 : vector<8x128xf32>
    %cst = arith.constant 1.000000e+00 : f32
    %17 = vector.broadcast %cst : f32 to vector<8x128xf32>
    %18 = arith.addf %17, %16 : vector<8x128xf32>
    %19 = arith.divf %17, %18 : vector<8x128xf32>
    %20 = vector.extract_strided_slice %13 {offsets = [0, 256], sizes = [8, 128], strides = [1, 1]} : vector<8x512xf32> to vector<8x128xf32>
    %cst_14 = arith.constant 0.000000e+00 : f32
    %21 = vector.broadcast %cst_14 : f32 to vector<8x128xf32>
    %22 = arith.maximumf %20, %21 : vector<8x128xf32>
    %23 = vector.extract_strided_slice %13 {offsets = [0, 384], sizes = [8, 128], strides = [1, 1]} : vector<8x512xf32> to vector<8x128xf32>
    %24 = arith.negf %23 : vector<8x128xf32>
    %25 = math.exp %24 : vector<8x128xf32>
    %cst_15 = arith.constant 1.000000e+00 : f32
    %26 = vector.broadcast %cst_15 : f32 to vector<8x128xf32>
    %27 = arith.addf %26, %25 : vector<8x128xf32>
    %28 = arith.divf %26, %27 : vector<8x128xf32>
    %29 = arith.mulf %19, %22 : vector<8x128xf32>
    %cst_16 = arith.constant 0.000000e+00 : f32
    %30 = vector.broadcast %cst_16 : f32 to vector<8x128xf32>
    %31 = arith.maximumf %29, %30 : vector<8x128xf32>
    %32 = arith.mulf %28, %31 : vector<8x128xf32>
    %c1 = arith.constant 1 : index
    %c0_17 = arith.constant 0 : index
    %c0_18 = arith.constant 0 : index
    %33 = vector.load %arg7[%c1, %c0_17, %c0_18] : memref<10x8x512xf32, #tpu.memory_space<vmem>>, vector<1x8x512xf32>
    %34 = vector.shape_cast %33 : vector<1x8x512xf32> to vector<8x512xf32>
    %cst_19 = arith.constant dense<0.000000e+00> : vector<8x512xf32>
    %35 = tpu.matmul %32, %11, %cst_19 {dimension_numbers = #tpu.dot_dimension_numbers<[1], [0], [0], [1], [0, 0, 1, 1], [], []>} : vector<8x128xf32>, vector<128x512xf32>, vector<8x512xf32> -> vector<8x512xf32>
    %36 = arith.addf %34, %35 : vector<8x512xf32>
    %37 = vector.extract_strided_slice %36 {offsets = [0, 0], sizes = [8, 128], strides = [1, 1]} : vector<8x512xf32> to vector<8x128xf32>
    %38 = arith.negf %37 : vector<8x128xf32>
    %39 = math.exp %38 : vector<8x128xf32>
    %cst_20 = arith.constant 1.000000e+00 : f32
    %40 = vector.broadcast %cst_20 : f32 to vector<8x128xf32>
    %41 = arith.addf %40, %39 : vector<8x128xf32>
    %42 = arith.divf %40, %41 : vector<8x128xf32>
    %43 = vector.extract_strided_slice %36 {offsets = [0, 128], sizes = [8, 128], strides = [1, 1]} : vector<8x512xf32> to vector<8x128xf32>
    %44 = arith.negf %43 : vector<8x128xf32>
    %45 = math.exp %44 : vector<8x128xf32>
    %cst_21 = arith.constant 1.000000e+00 : f32
    %46 = vector.broadcast %cst_21 : f32 to vector<8x128xf32>
    %47 = arith.addf %46, %45 : vector<8x128xf32>
    %48 = arith.divf %46, %47 : vector<8x128xf32>
    %49 = vector.extract_strided_slice %36 {offsets = [0, 256], sizes = [8, 128], strides = [1, 1]} : vector<8x512xf32> to vector<8x128xf32>
    %cst_22 = arith.constant 0.000000e+00 : f32
    %50 = vector.broadcast %cst_22 : f32 to vector<8x128xf32>
    %51 = arith.maximumf %49, %50 : vector<8x128xf32>
    %52 = vector.extract_strided_slice %36 {offsets = [0, 384], sizes = [8, 128], strides = [1, 1]} : vector<8x512xf32> to vector<8x128xf32>
    %53 = arith.negf %52 : vector<8x128xf32>
    %54 = math.exp %53 : vector<8x128xf32>
    %cst_23 = arith.constant 1.000000e+00 : f32
    %55 = vector.broadcast %cst_23 : f32 to vector<8x128xf32>
    %56 = arith.addf %55, %54 : vector<8x128xf32>
    %57 = arith.divf %55, %56 : vector<8x128xf32>
    %58 = arith.mulf %48, %29 : vector<8x128xf32>
    %59 = arith.mulf %42, %51 : vector<8x128xf32>
    %60 = arith.addf %58, %59 : vector<8x128xf32>
    %cst_24 = arith.constant 0.000000e+00 : f32
    %61 = vector.broadcast %cst_24 : f32 to vector<8x128xf32>
    %62 = arith.maximumf %60, %61 : vector<8x128xf32>
    %63 = arith.mulf %57, %62 : vector<8x128xf32>
    %c2 = arith.constant 2 : index
    %c0_25 = arith.constant 0 : index
    %c0_26 = arith.constant 0 : index
    %64 = vector.load %arg7[%c2, %c0_25, %c0_26] : memref<10x8x512xf32, #tpu.memory_space<vmem>>, vector<1x8x512xf32>
    %65 = vector.shape_cast %64 : vector<1x8x512xf32> to vector<8x512xf32>
    %cst_27 = arith.constant dense<0.000000e+00> : vector<8x512xf32>
    %66 = tpu.matmul %63, %11, %cst_27 {dimension_numbers = #tpu.dot_dimension_numbers<[1], [0], [0], [1], [0, 0, 1, 1], [], []>} : vector<8x128xf32>, vector<128x512xf32>, vector<8x512xf32> -> vector<8x512xf32>
    %67 = arith.addf %65, %66 : vector<8x512xf32>
    %68 = vector.extract_strided_slice %67 {offsets = [0, 0], sizes = [8, 128], strides = [1, 1]} : vector<8x512xf32> to vector<8x128xf32>
    %69 = arith.negf %68 : vector<8x128xf32>
    %70 = math.exp %69 : vector<8x128xf32>
    %cst_28 = arith.constant 1.000000e+00 : f32
    %71 = vector.broadcast %cst_28 : f32 to vector<8x128xf32>
    %72 = arith.addf %71, %70 : vector<8x128xf32>
    %73 = arith.divf %71, %72 : vector<8x128xf32>
    %74 = vector.extract_strided_slice %67 {offsets = [0, 128], sizes = [8, 128], strides = [1, 1]} : vector<8x512xf32> to vector<8x128xf32>
    %75 = arith.negf %74 : vector<8x128xf32>
    %76 = math.exp %75 : vector<8x128xf32>
    %cst_29 = arith.constant 1.000000e+00 : f32
    %77 = vector.broadcast %cst_29 : f32 to vector<8x128xf32>
    %78 = arith.addf %77, %76 : vector<8x128xf32>
    %79 = arith.divf %77, %78 : vector<8x128xf32>
    %80 = vector.extract_strided_slice %67 {offsets = [0, 256], sizes = [8, 128], strides = [1, 1]} : vector<8x512xf32> to vector<8x128xf32>
    %cst_30 = arith.constant 0.000000e+00 : f32
    %81 = vector.broadcast %cst_30 : f32 to vector<8x128xf32>
    %82 = arith.maximumf %80, %81 : vector<8x128xf32>
    %83 = vector.extract_strided_slice %67 {offsets = [0, 384], sizes = [8, 128], strides = [1, 1]} : vector<8x512xf32> to vector<8x128xf32>
    %84 = arith.negf %83 : vector<8x128xf32>
    %85 = math.exp %84 : vector<8x128xf32>
    %cst_31 = arith.constant 1.000000e+00 : f32
    %86 = vector.broadcast %cst_31 : f32 to vector<8x128xf32>
    %87 = arith.addf %86, %85 : vector<8x128xf32>
    %88 = arith.divf %86, %87 : vector<8x128xf32>
    %89 = arith.mulf %79, %60 : vector<8x128xf32>
    %90 = arith.mulf %73, %82 : vector<8x128xf32>
    %91 = arith.addf %89, %90 : vector<8x128xf32>
    %cst_32 = arith.constant 0.000000e+00 : f32
    %92 = vector.broadcast %cst_32 : f32 to vector<8x128xf32>
    %93 = arith.maximumf %91, %92 : vector<8x128xf32>
    %94 = arith.mulf %88, %93 : vector<8x128xf32>
    %c3 = arith.constant 3 : index
    %c0_33 = arith.constant 0 : index
    %c0_34 = arith.constant 0 : index
    %95 = vector.load %arg7[%c3, %c0_33, %c0_34] : memref<10x8x512xf32, #tpu.memory_space<vmem>>, vector<1x8x512xf32>
    %96 = vector.shape_cast %95 : vector<1x8x512xf32> to vector<8x512xf32>
    %cst_35 = arith.constant dense<0.000000e+00> : vector<8x512xf32>
    %97 = tpu.matmul %94, %11, %cst_35 {dimension_numbers = #tpu.dot_dimension_numbers<[1], [0], [0], [1], [0, 0, 1, 1], [], []>} : vector<8x128xf32>, vector<128x512xf32>, vector<8x512xf32> -> vector<8x512xf32>
    %98 = arith.addf %96, %97 : vector<8x512xf32>
    %99 = vector.extract_strided_slice %98 {offsets = [0, 0], sizes = [8, 128], strides = [1, 1]} : vector<8x512xf32> to vector<8x128xf32>
    %100 = arith.negf %99 : vector<8x128xf32>
    %101 = math.exp %100 : vector<8x128xf32>
    %cst_36 = arith.constant 1.000000e+00 : f32
    %102 = vector.broadcast %cst_36 : f32 to vector<8x128xf32>
    %103 = arith.addf %102, %101 : vector<8x128xf32>
    %104 = arith.divf %102, %103 : vector<8x128xf32>
    %105 = vector.extract_strided_slice %98 {offsets = [0, 128], sizes = [8, 128], strides = [1, 1]} : vector<8x512xf32> to vector<8x128xf32>
    %106 = arith.negf %105 : vector<8x128xf32>
    %107 = math.exp %106 : vector<8x128xf32>
    %cst_37 = arith.constant 1.000000e+00 : f32
    %108 = vector.broadcast %cst_37 : f32 to vector<8x128xf32>
    %109 = arith.addf %108, %107 : vector<8x128xf32>
    %110 = arith.divf %108, %109 : vector<8x128xf32>
    %111 = vector.extract_strided_slice %98 {offsets = [0, 256], sizes = [8, 128], strides = [1, 1]} : vector<8x512xf32> to vector<8x128xf32>
    %cst_38 = arith.constant 0.000000e+00 : f32
    %112 = vector.broadcast %cst_38 : f32 to vector<8x128xf32>
    %113 = arith.maximumf %111, %112 : vector<8x128xf32>
    %114 = vector.extract_strided_slice %98 {offsets = [0, 384], sizes = [8, 128], strides = [1, 1]} : vector<8x512xf32> to vector<8x128xf32>
    %115 = arith.negf %114 : vector<8x128xf32>
    %116 = math.exp %115 : vector<8x128xf32>
    %cst_39 = arith.constant 1.000000e+00 : f32
    %117 = vector.broadcast %cst_39 : f32 to vector<8x128xf32>
    %118 = arith.addf %117, %116 : vector<8x128xf32>
    %119 = arith.divf %117, %118 : vector<8x128xf32>
    %120 = arith.mulf %110, %91 : vector<8x128xf32>
    %121 = arith.mulf %104, %113 : vector<8x128xf32>
    %122 = arith.addf %120, %121 : vector<8x128xf32>
    %cst_40 = arith.constant 0.000000e+00 : f32
    %123 = vector.broadcast %cst_40 : f32 to vector<8x128xf32>
    %124 = arith.maximumf %122, %123 : vector<8x128xf32>
    %125 = arith.mulf %119, %124 : vector<8x128xf32>
    %c4 = arith.constant 4 : index
    %c0_41 = arith.constant 0 : index
    %c0_42 = arith.constant 0 : index
    %126 = vector.load %arg7[%c4, %c0_41, %c0_42] : memref<10x8x512xf32, #tpu.memory_space<vmem>>, vector<1x8x512xf32>
    %127 = vector.shape_cast %126 : vector<1x8x512xf32> to vector<8x512xf32>
    %cst_43 = arith.constant dense<0.000000e+00> : vector<8x512xf32>
    %128 = tpu.matmul %125, %11, %cst_43 {dimension_numbers = #tpu.dot_dimension_numbers<[1], [0], [0], [1], [0, 0, 1, 1], [], []>} : vector<8x128xf32>, vector<128x512xf32>, vector<8x512xf32> -> vector<8x512xf32>
    %129 = arith.addf %127, %128 : vector<8x512xf32>
    %130 = vector.extract_strided_slice %129 {offsets = [0, 0], sizes = [8, 128], strides = [1, 1]} : vector<8x512xf32> to vector<8x128xf32>
    %131 = arith.negf %130 : vector<8x128xf32>
    %132 = math.exp %131 : vector<8x128xf32>
    %cst_44 = arith.constant 1.000000e+00 : f32
    %133 = vector.broadcast %cst_44 : f32 to vector<8x128xf32>
    %134 = arith.addf %133, %132 : vector<8x128xf32>
    %135 = arith.divf %133, %134 : vector<8x128xf32>
    %136 = vector.extract_strided_slice %129 {offsets = [0, 128], sizes = [8, 128], strides = [1, 1]} : vector<8x512xf32> to vector<8x128xf32>
    %137 = arith.negf %136 : vector<8x128xf32>
    %138 = math.exp %137 : vector<8x128xf32>
    %cst_45 = arith.constant 1.000000e+00 : f32
    %139 = vector.broadcast %cst_45 : f32 to vector<8x128xf32>
    %140 = arith.addf %139, %138 : vector<8x128xf32>
    %141 = arith.divf %139, %140 : vector<8x128xf32>
    %142 = vector.extract_strided_slice %129 {offsets = [0, 256], sizes = [8, 128], strides = [1, 1]} : vector<8x512xf32> to vector<8x128xf32>
    %cst_46 = arith.constant 0.000000e+00 : f32
    %143 = vector.broadcast %cst_46 : f32 to vector<8x128xf32>
    %144 = arith.maximumf %142, %143 : vector<8x128xf32>
    %145 = vector.extract_strided_slice %129 {offsets = [0, 384], sizes = [8, 128], strides = [1, 1]} : vector<8x512xf32> to vector<8x128xf32>
    %146 = arith.negf %145 : vector<8x128xf32>
    %147 = math.exp %146 : vector<8x128xf32>
    %cst_47 = arith.constant 1.000000e+00 : f32
    %148 = vector.broadcast %cst_47 : f32 to vector<8x128xf32>
    %149 = arith.addf %148, %147 : vector<8x128xf32>
    %150 = arith.divf %148, %149 : vector<8x128xf32>
    %151 = arith.mulf %141, %122 : vector<8x128xf32>
    %152 = arith.mulf %135, %144 : vector<8x128xf32>
    %153 = arith.addf %151, %152 : vector<8x128xf32>
    %cst_48 = arith.constant 0.000000e+00 : f32
    %154 = vector.broadcast %cst_48 : f32 to vector<8x128xf32>
    %155 = arith.maximumf %153, %154 : vector<8x128xf32>
    %156 = arith.mulf %150, %155 : vector<8x128xf32>
    %c5 = arith.constant 5 : index
    %c0_49 = arith.constant 0 : index
    %c0_50 = arith.constant 0 : index
    %157 = vector.load %arg7[%c5, %c0_49, %c0_50] : memref<10x8x512xf32, #tpu.memory_space<vmem>>, vector<1x8x512xf32>
    %158 = vector.shape_cast %157 : vector<1x8x512xf32> to vector<8x512xf32>
    %cst_51 = arith.constant dense<0.000000e+00> : vector<8x512xf32>
    %159 = tpu.matmul %156, %11, %cst_51 {dimension_numbers = #tpu.dot_dimension_numbers<[1], [0], [0], [1], [0, 0, 1, 1], [], []>} : vector<8x128xf32>, vector<128x512xf32>, vector<8x512xf32> -> vector<8x512xf32>
    %160 = arith.addf %158, %159 : vector<8x512xf32>
    %161 = vector.extract_strided_slice %160 {offsets = [0, 0], sizes = [8, 128], strides = [1, 1]} : vector<8x512xf32> to vector<8x128xf32>
    %162 = arith.negf %161 : vector<8x128xf32>
    %163 = math.exp %162 : vector<8x128xf32>
    %cst_52 = arith.constant 1.000000e+00 : f32
    %164 = vector.broadcast %cst_52 : f32 to vector<8x128xf32>
    %165 = arith.addf %164, %163 : vector<8x128xf32>
    %166 = arith.divf %164, %165 : vector<8x128xf32>
    %167 = vector.extract_strided_slice %160 {offsets = [0, 128], sizes = [8, 128], strides = [1, 1]} : vector<8x512xf32> to vector<8x128xf32>
    %168 = arith.negf %167 : vector<8x128xf32>
    %169 = math.exp %168 : vector<8x128xf32>
    %cst_53 = arith.constant 1.000000e+00 : f32
    %170 = vector.broadcast %cst_53 : f32 to vector<8x128xf32>
    %171 = arith.addf %170, %169 : vector<8x128xf32>
    %172 = arith.divf %170, %171 : vector<8x128xf32>
    %173 = vector.extract_strided_slice %160 {offsets = [0, 256], sizes = [8, 128], strides = [1, 1]} : vector<8x512xf32> to vector<8x128xf32>
    %cst_54 = arith.constant 0.000000e+00 : f32
    %174 = vector.broadcast %cst_54 : f32 to vector<8x128xf32>
    %175 = arith.maximumf %173, %174 : vector<8x128xf32>
    %176 = vector.extract_strided_slice %160 {offsets = [0, 384], sizes = [8, 128], strides = [1, 1]} : vector<8x512xf32> to vector<8x128xf32>
    %177 = arith.negf %176 : vector<8x128xf32>
    %178 = math.exp %177 : vector<8x128xf32>
    %cst_55 = arith.constant 1.000000e+00 : f32
    %179 = vector.broadcast %cst_55 : f32 to vector<8x128xf32>
    %180 = arith.addf %179, %178 : vector<8x128xf32>
    %181 = arith.divf %179, %180 : vector<8x128xf32>
    %182 = arith.mulf %172, %153 : vector<8x128xf32>
    %183 = arith.mulf %166, %175 : vector<8x128xf32>
    %184 = arith.addf %182, %183 : vector<8x128xf32>
    %cst_56 = arith.constant 0.000000e+00 : f32
    %185 = vector.broadcast %cst_56 : f32 to vector<8x128xf32>
    %186 = arith.maximumf %184, %185 : vector<8x128xf32>
    %187 = arith.mulf %181, %186 : vector<8x128xf32>
    %c6 = arith.constant 6 : index
    %c0_57 = arith.constant 0 : index
    %c0_58 = arith.constant 0 : index
    %188 = vector.load %arg7[%c6, %c0_57, %c0_58] : memref<10x8x512xf32, #tpu.memory_space<vmem>>, vector<1x8x512xf32>
    %189 = vector.shape_cast %188 : vector<1x8x512xf32> to vector<8x512xf32>
    %cst_59 = arith.constant dense<0.000000e+00> : vector<8x512xf32>
    %190 = tpu.matmul %187, %11, %cst_59 {dimension_numbers = #tpu.dot_dimension_numbers<[1], [0], [0], [1], [0, 0, 1, 1], [], []>} : vector<8x128xf32>, vector<128x512xf32>, vector<8x512xf32> -> vector<8x512xf32>
    %191 = arith.addf %189, %190 : vector<8x512xf32>
    %192 = vector.extract_strided_slice %191 {offsets = [0, 0], sizes = [8, 128], strides = [1, 1]} : vector<8x512xf32> to vector<8x128xf32>
    %193 = arith.negf %192 : vector<8x128xf32>
    %194 = math.exp %193 : vector<8x128xf32>
    %cst_60 = arith.constant 1.000000e+00 : f32
    %195 = vector.broadcast %cst_60 : f32 to vector<8x128xf32>
    %196 = arith.addf %195, %194 : vector<8x128xf32>
    %197 = arith.divf %195, %196 : vector<8x128xf32>
    %198 = vector.extract_strided_slice %191 {offsets = [0, 128], sizes = [8, 128], strides = [1, 1]} : vector<8x512xf32> to vector<8x128xf32>
    %199 = arith.negf %198 : vector<8x128xf32>
    %200 = math.exp %199 : vector<8x128xf32>
    %cst_61 = arith.constant 1.000000e+00 : f32
    %201 = vector.broadcast %cst_61 : f32 to vector<8x128xf32>
    %202 = arith.addf %201, %200 : vector<8x128xf32>
    %203 = arith.divf %201, %202 : vector<8x128xf32>
    %204 = vector.extract_strided_slice %191 {offsets = [0, 256], sizes = [8, 128], strides = [1, 1]} : vector<8x512xf32> to vector<8x128xf32>
    %cst_62 = arith.constant 0.000000e+00 : f32
    %205 = vector.broadcast %cst_62 : f32 to vector<8x128xf32>
    %206 = arith.maximumf %204, %205 : vector<8x128xf32>
    %207 = vector.extract_strided_slice %191 {offsets = [0, 384], sizes = [8, 128], strides = [1, 1]} : vector<8x512xf32> to vector<8x128xf32>
    %208 = arith.negf %207 : vector<8x128xf32>
    %209 = math.exp %208 : vector<8x128xf32>
    %cst_63 = arith.constant 1.000000e+00 : f32
    %210 = vector.broadcast %cst_63 : f32 to vector<8x128xf32>
    %211 = arith.addf %210, %209 : vector<8x128xf32>
    %212 = arith.divf %210, %211 : vector<8x128xf32>
    %213 = arith.mulf %203, %184 : vector<8x128xf32>
    %214 = arith.mulf %197, %206 : vector<8x128xf32>
    %215 = arith.addf %213, %214 : vector<8x128xf32>
    %cst_64 = arith.constant 0.000000e+00 : f32
    %216 = vector.broadcast %cst_64 : f32 to vector<8x128xf32>
    %217 = arith.maximumf %215, %216 : vector<8x128xf32>
    %218 = arith.mulf %212, %217 : vector<8x128xf32>
    %c7 = arith.constant 7 : index
    %c0_65 = arith.constant 0 : index
    %c0_66 = arith.constant 0 : index
    %219 = vector.load %arg7[%c7, %c0_65, %c0_66] : memref<10x8x512xf32, #tpu.memory_space<vmem>>, vector<1x8x512xf32>
    %220 = vector.shape_cast %219 : vector<1x8x512xf32> to vector<8x512xf32>
    %cst_67 = arith.constant dense<0.000000e+00> : vector<8x512xf32>
    %221 = tpu.matmul %218, %11, %cst_67 {dimension_numbers = #tpu.dot_dimension_numbers<[1], [0], [0], [1], [0, 0, 1, 1], [], []>} : vector<8x128xf32>, vector<128x512xf32>, vector<8x512xf32> -> vector<8x512xf32>
    %222 = arith.addf %220, %221 : vector<8x512xf32>
    %223 = vector.extract_strided_slice %222 {offsets = [0, 0], sizes = [8, 128], strides = [1, 1]} : vector<8x512xf32> to vector<8x128xf32>
    %224 = arith.negf %223 : vector<8x128xf32>
    %225 = math.exp %224 : vector<8x128xf32>
    %cst_68 = arith.constant 1.000000e+00 : f32
    %226 = vector.broadcast %cst_68 : f32 to vector<8x128xf32>
    %227 = arith.addf %226, %225 : vector<8x128xf32>
    %228 = arith.divf %226, %227 : vector<8x128xf32>
    %229 = vector.extract_strided_slice %222 {offsets = [0, 128], sizes = [8, 128], strides = [1, 1]} : vector<8x512xf32> to vector<8x128xf32>
    %230 = arith.negf %229 : vector<8x128xf32>
    %231 = math.exp %230 : vector<8x128xf32>
    %cst_69 = arith.constant 1.000000e+00 : f32
    %232 = vector.broadcast %cst_69 : f32 to vector<8x128xf32>
    %233 = arith.addf %232, %231 : vector<8x128xf32>
    %234 = arith.divf %232, %233 : vector<8x128xf32>
    %235 = vector.extract_strided_slice %222 {offsets = [0, 256], sizes = [8, 128], strides = [1, 1]} : vector<8x512xf32> to vector<8x128xf32>
    %cst_70 = arith.constant 0.000000e+00 : f32
    %236 = vector.broadcast %cst_70 : f32 to vector<8x128xf32>
    %237 = arith.maximumf %235, %236 : vector<8x128xf32>
    %238 = vector.extract_strided_slice %222 {offsets = [0, 384], sizes = [8, 128], strides = [1, 1]} : vector<8x512xf32> to vector<8x128xf32>
    %239 = arith.negf %238 : vector<8x128xf32>
    %240 = math.exp %239 : vector<8x128xf32>
    %cst_71 = arith.constant 1.000000e+00 : f32
    %241 = vector.broadcast %cst_71 : f32 to vector<8x128xf32>
    %242 = arith.addf %241, %240 : vector<8x128xf32>
    %243 = arith.divf %241, %242 : vector<8x128xf32>
    %244 = arith.mulf %234, %215 : vector<8x128xf32>
    %245 = arith.mulf %228, %237 : vector<8x128xf32>
    %246 = arith.addf %244, %245 : vector<8x128xf32>
    %cst_72 = arith.constant 0.000000e+00 : f32
    %247 = vector.broadcast %cst_72 : f32 to vector<8x128xf32>
    %248 = arith.maximumf %246, %247 : vector<8x128xf32>
    %249 = arith.mulf %243, %248 : vector<8x128xf32>
    %c8 = arith.constant 8 : index
    %c0_73 = arith.constant 0 : index
    %c0_74 = arith.constant 0 : index
    %250 = vector.load %arg7[%c8, %c0_73, %c0_74] : memref<10x8x512xf32, #tpu.memory_space<vmem>>, vector<1x8x512xf32>
    %251 = vector.shape_cast %250 : vector<1x8x512xf32> to vector<8x512xf32>
    %cst_75 = arith.constant dense<0.000000e+00> : vector<8x512xf32>
    %252 = tpu.matmul %249, %11, %cst_75 {dimension_numbers = #tpu.dot_dimension_numbers<[1], [0], [0], [1], [0, 0, 1, 1], [], []>} : vector<8x128xf32>, vector<128x512xf32>, vector<8x512xf32> -> vector<8x512xf32>
    %253 = arith.addf %251, %252 : vector<8x512xf32>
    %254 = vector.extract_strided_slice %253 {offsets = [0, 0], sizes = [8, 128], strides = [1, 1]} : vector<8x512xf32> to vector<8x128xf32>
    %255 = arith.negf %254 : vector<8x128xf32>
    %256 = math.exp %255 : vector<8x128xf32>
    %cst_76 = arith.constant 1.000000e+00 : f32
    %257 = vector.broadcast %cst_76 : f32 to vector<8x128xf32>
    %258 = arith.addf %257, %256 : vector<8x128xf32>
    %259 = arith.divf %257, %258 : vector<8x128xf32>
    %260 = vector.extract_strided_slice %253 {offsets = [0, 128], sizes = [8, 128], strides = [1, 1]} : vector<8x512xf32> to vector<8x128xf32>
    %261 = arith.negf %260 : vector<8x128xf32>
    %262 = math.exp %261 : vector<8x128xf32>
    %cst_77 = arith.constant 1.000000e+00 : f32
    %263 = vector.broadcast %cst_77 : f32 to vector<8x128xf32>
    %264 = arith.addf %263, %262 : vector<8x128xf32>
    %265 = arith.divf %263, %264 : vector<8x128xf32>
    %266 = vector.extract_strided_slice %253 {offsets = [0, 256], sizes = [8, 128], strides = [1, 1]} : vector<8x512xf32> to vector<8x128xf32>
    %cst_78 = arith.constant 0.000000e+00 : f32
    %267 = vector.broadcast %cst_78 : f32 to vector<8x128xf32>
    %268 = arith.maximumf %266, %267 : vector<8x128xf32>
    %269 = vector.extract_strided_slice %253 {offsets = [0, 384], sizes = [8, 128], strides = [1, 1]} : vector<8x512xf32> to vector<8x128xf32>
    %270 = arith.negf %269 : vector<8x128xf32>
    %271 = math.exp %270 : vector<8x128xf32>
    %cst_79 = arith.constant 1.000000e+00 : f32
    %272 = vector.broadcast %cst_79 : f32 to vector<8x128xf32>
    %273 = arith.addf %272, %271 : vector<8x128xf32>
    %274 = arith.divf %272, %273 : vector<8x128xf32>
    %275 = arith.mulf %265, %246 : vector<8x128xf32>
    %276 = arith.mulf %259, %268 : vector<8x128xf32>
    %277 = arith.addf %275, %276 : vector<8x128xf32>
    %cst_80 = arith.constant 0.000000e+00 : f32
    %278 = vector.broadcast %cst_80 : f32 to vector<8x128xf32>
    %279 = arith.maximumf %277, %278 : vector<8x128xf32>
    %280 = arith.mulf %274, %279 : vector<8x128xf32>
    %c9 = arith.constant 9 : index
    %c0_81 = arith.constant 0 : index
    %c0_82 = arith.constant 0 : index
    %281 = vector.load %arg7[%c9, %c0_81, %c0_82] : memref<10x8x512xf32, #tpu.memory_space<vmem>>, vector<1x8x512xf32>
    %282 = vector.shape_cast %281 : vector<1x8x512xf32> to vector<8x512xf32>
    %cst_83 = arith.constant dense<0.000000e+00> : vector<8x512xf32>
    %283 = tpu.matmul %280, %11, %cst_83 {dimension_numbers = #tpu.dot_dimension_numbers<[1], [0], [0], [1], [0, 0, 1, 1], [], []>} : vector<8x128xf32>, vector<128x512xf32>, vector<8x512xf32> -> vector<8x512xf32>
    %284 = arith.addf %282, %283 : vector<8x512xf32>
    %285 = vector.extract_strided_slice %284 {offsets = [0, 0], sizes = [8, 128], strides = [1, 1]} : vector<8x512xf32> to vector<8x128xf32>
    %286 = arith.negf %285 : vector<8x128xf32>
    %287 = math.exp %286 : vector<8x128xf32>
    %cst_84 = arith.constant 1.000000e+00 : f32
    %288 = vector.broadcast %cst_84 : f32 to vector<8x128xf32>
    %289 = arith.addf %288, %287 : vector<8x128xf32>
    %290 = arith.divf %288, %289 : vector<8x128xf32>
    %291 = vector.extract_strided_slice %284 {offsets = [0, 128], sizes = [8, 128], strides = [1, 1]} : vector<8x512xf32> to vector<8x128xf32>
    %292 = arith.negf %291 : vector<8x128xf32>
    %293 = math.exp %292 : vector<8x128xf32>
    %cst_85 = arith.constant 1.000000e+00 : f32
    %294 = vector.broadcast %cst_85 : f32 to vector<8x128xf32>
    %295 = arith.addf %294, %293 : vector<8x128xf32>
    %296 = arith.divf %294, %295 : vector<8x128xf32>
    %297 = vector.extract_strided_slice %284 {offsets = [0, 256], sizes = [8, 128], strides = [1, 1]} : vector<8x512xf32> to vector<8x128xf32>
    %cst_86 = arith.constant 0.000000e+00 : f32
    %298 = vector.broadcast %cst_86 : f32 to vector<8x128xf32>
    %299 = arith.maximumf %297, %298 : vector<8x128xf32>
    %300 = vector.extract_strided_slice %284 {offsets = [0, 384], sizes = [8, 128], strides = [1, 1]} : vector<8x512xf32> to vector<8x128xf32>
    %301 = arith.negf %300 : vector<8x128xf32>
    %302 = math.exp %301 : vector<8x128xf32>
    %cst_87 = arith.constant 1.000000e+00 : f32
    %303 = vector.broadcast %cst_87 : f32 to vector<8x128xf32>
    %304 = arith.addf %303, %302 : vector<8x128xf32>
    %305 = arith.divf %303, %304 : vector<8x128xf32>
    %306 = arith.mulf %296, %277 : vector<8x128xf32>
    %307 = arith.mulf %290, %299 : vector<8x128xf32>
    %308 = arith.addf %306, %307 : vector<8x128xf32>
    %cst_88 = arith.constant 0.000000e+00 : f32
    %309 = vector.broadcast %cst_88 : f32 to vector<8x128xf32>
    %310 = arith.maximumf %308, %309 : vector<8x128xf32>
    %311 = arith.mulf %305, %310 : vector<8x128xf32>
    %312 = vector.shape_cast %32 : vector<8x128xf32> to vector<1x8x128xf32>
    %313 = vector.shape_cast %63 : vector<8x128xf32> to vector<1x8x128xf32>
    %314 = vector.shape_cast %94 : vector<8x128xf32> to vector<1x8x128xf32>
    %315 = vector.shape_cast %125 : vector<8x128xf32> to vector<1x8x128xf32>
    %316 = vector.shape_cast %156 : vector<8x128xf32> to vector<1x8x128xf32>
    %317 = vector.shape_cast %187 : vector<8x128xf32> to vector<1x8x128xf32>
    %318 = vector.shape_cast %218 : vector<8x128xf32> to vector<1x8x128xf32>
    %319 = vector.shape_cast %249 : vector<8x128xf32> to vector<1x8x128xf32>
    %320 = vector.shape_cast %280 : vector<8x128xf32> to vector<1x8x128xf32>
    %321 = vector.shape_cast %311 : vector<8x128xf32> to vector<1x8x128xf32>
    %322 = tpu.concatenate %312, %313, %314, %315, %316, %317, %318, %319, %320, %321 in 0 : vector<1x8x128xf32>, vector<1x8x128xf32>, vector<1x8x128xf32>, vector<1x8x128xf32>, vector<1x8x128xf32>, vector<1x8x128xf32>, vector<1x8x128xf32>, vector<1x8x128xf32>, vector<1x8x128xf32>, vector<1x8x128xf32> -> vector<10x8x128xf32>
    %c0_89 = arith.constant 0 : index
    %c0_90 = arith.constant 0 : index
    %323 = vector.load %arg4[%c0_89, %c0_90] : memref<1x128xf32, #tpu.memory_space<vmem>>, vector<1x128xf32>
    %324 = vector.shape_cast %323 : vector<1x128xf32> to vector<1x1x128xf32>
    %325 = vector.broadcast %324 : vector<1x1x128xf32> to vector<10x8x128xf32>
    %326 = arith.mulf %322, %325 : vector<10x8x128xf32>
    %cst_91 = arith.constant dense<0.000000e+00> : vector<10x8xf32>
    %327 = vector.multi_reduction <add>, %326, %cst_91 [2] : vector<10x8x128xf32> to vector<10x8xf32>
    %c0_92 = arith.constant 0 : index
    %c0_93 = arith.constant 0 : index
    %328 = vector.load %arg5[%c0_92, %c0_93] : memref<1x1xf32, #tpu.memory_space<vmem>>, vector<1x1xf32>
    %329 = vector.broadcast %328 : vector<1x1xf32> to vector<10x8xf32>
    %330 = arith.addf %327, %329 : vector<10x8xf32>
    %c0_94 = arith.constant 0 : index
    %c0_95 = arith.constant 0 : index
    %331 = vector.load %arg6[%c0_94, %c0_95] : memref<10x8xf32, #tpu.memory_space<vmem>>, vector<10x8xf32>
    tpu.vector_store %arg6[%c0_94, %c0_95], %330 {strides = array<i32>} : memref<10x8xf32, #tpu.memory_space<vmem>>, vector<10x8xf32>,
    return
  }
}

</mosaic_0001>

<llo_original>
// kernel: tpu_custom_call.1
$region0: #{tpu_custom_call.1}
  #allocation0 [shape = 'u32[]', space=smem, size = 0x4, offset = 0x4, fixed_abs, tag = 'smem constant byte address 0x4 - core index']
  #allocation1 [shape = 'u32[144,128]{1,0:T(1,128)}', space=vmem, size = 0x12000, scoped, tag = 'internal scratch']
  #allocation2 [shape = 'f32[10,8,512]{2,1,0:T(8,128)}', space=vmem, size = 0x28000, scoped, tag = 'scratch operand']
  #allocation3 [shape = 'f32[1,1]{1,0:T(1,128)S(1)}', space=vmem, size = 0x200, scoped, tag = 'scoped memory for tpu_custom_call.1']
  %s0 = inlined_call_operand.vmem [shape: f32[10,8,1], index: 0, kind: input, shape index: {}]
  %s1 = inlined_call_operand.vmem [shape: f32[1,512], index: 1, kind: input, shape index: {}]
  %s2 = inlined_call_operand.hbm [shape: f32[128,512], index: 2, kind: input, shape index: {}]
  %s3 = inlined_call_operand.vmem [shape: f32[1,512], index: 3, kind: input, shape index: {}]
  %s4 = inlined_call_operand.vmem [shape: f32[1,128], index: 4, kind: input, shape index: {}]
  %s5 = inlined_call_operand.<no memory space> [shape: f32[1,1], index: 5, kind: input, shape index: {}]
  %s6 = inlined_call_operand.vmem [shape: f32[10,8], index: 6, kind: output, shape index: {}]
  %s7 = sld [smem:[#allocation0]]
  $region38: #{tpu_custom_call.1} parent=0
    _
  %s9 = ssub.s32 1, %s7
  %s10 = scalar_select 0, %s9, %s7
  %v11 = vstv %s5
  %12 = vst [vmem:[#allocation3] sm:$0x1] %v11
  $region1: #{tpu_custom_call.1} parent=0
    #allocation4 [shape = 'u8[262144]{0}', space=vmem, size = 0x40000, scoped, tag = 'input window, operand 2, single buffered']
    #allocation5 [shape = 's32[1]{0}', space=sflag, size = 0x4, scoped, tag = 'scoped memory for tpu_custom_call.1']
    %13 = vsyncpa [#allocation5], 0
    // Predicated region
    $region2: #{tpu_custom_call.1} parent=1 // pred_check
      _
    $region3: #{tpu_custom_call.1} parent=1 // pred_check_branch
      %15 = sbr.rel (0) target = $region5
    $region4: #{tpu_custom_call.1} parent=1 // pred_region
      _
    $region5: #{tpu_custom_call.1} parent=1 // pred_fallthru
      _
    // Predicated region
    $region6: #{tpu_custom_call.1} parent=1 // pred_check
      _
    $region7: #{tpu_custom_call.1} parent=1 // pred_check_branch
      %17 = sbr.rel (0) target = $region9
    $region8: #{tpu_custom_call.1} parent=1 // pred_region
      _
    $region9: #{tpu_custom_call.1} parent=1 // pred_fallthru
      _
    // Predicated region
    $region10: #{tpu_custom_call.1} parent=1 // pred_check
      _
    $region11: #{tpu_custom_call.1} parent=1 // pred_check_branch
      %19 = sbr.rel (0) target = $region13
    $region12: #{tpu_custom_call.1} parent=1 // pred_region
      %s21 = ssub.s32 8192, 8192
      %22 = vsyncadd [#allocation5], %s21
      %s23 = sshll.u32 [#allocation4], 4
      %s24 = int_to_ptr.vmem [resolvable:$true] %s23
      %29 = dma.hbm_to_vmem [thread:$0]  %s2, 8192, %s24, [#allocation5], 512, 512, 32
    $region13: #{tpu_custom_call.1} parent=1 // pred_fallthru
      _
    // Predicated region
    $region14: #{tpu_custom_call.1} parent=1 // pred_check
      _
    $region15: #{tpu_custom_call.1} parent=1 // pred_check_branch
      %31 = sbr.rel (0) target = $region17
    $region16: #{tpu_custom_call.1} parent=1 // pred_region
      _
    $region17: #{tpu_custom_call.1} parent=1 // pred_fallthru
      _
    // Predicated region
    $region18: #{tpu_custom_call.1} parent=1 // pred_check
      _
    $region19: #{tpu_custom_call.1} parent=1 // pred_check_branch
      %33 = sbr.rel (0) target = $region21
    $region20: #{tpu_custom_call.1} parent=1 // pred_region
      _
    $region21: #{tpu_custom_call.1} parent=1 // pred_fallthru
      _
    // Predicated region
    $region22: #{tpu_custom_call.1} parent=1 // pred_check
      _
    $region23: #{tpu_custom_call.1} parent=1 // pred_check_branch
      %35 = sbr.rel (0) target = $region25
    $region24: #{tpu_custom_call.1} parent=1 // pred_region
      _
    $region25: #{tpu_custom_call.1} parent=1 // pred_fallthru
      _
    // Predicated region
    $region26: #{tpu_custom_call.1} parent=1 // pred_check
      _
    $region27: #{tpu_custom_call.1} parent=1 // pred_check_branch
      %37 = sbr.rel (0) target = $region29
    $region28: #{tpu_custom_call.1} parent=1 // pred_region
      %38 = dma.done [#allocation5], 8192
    $region29: #{tpu_custom_call.1} parent=1 // pred_fallthru
      _
    %v39 = vld [vmem:[%s0] sm:$0xff]
    %v40 = vld [vmem:[%s0 + $0x8] sm:$0xff]
    %v41 = vld [vmem:[%s0 + $0x10] sm:$0xff]
    %v42 = vld [vmem:[%s0 + $0x18] sm:$0xff]
    %v43 = vld [vmem:[%s0 + $0x20] sm:$0xff]
    %v44 = vld [vmem:[%s0 + $0x28] sm:$0xff]
    %v45 = vld [vmem:[%s0 + $0x30] sm:$0xff]
    %v46 = vld [vmem:[%s0 + $0x38] sm:$0xff]
    %v47 = vld [vmem:[%s0 + $0x40] sm:$0xff]
    %v48 = vld [vmem:[%s0 + $0x48] sm:$0xff]
    %v49 = vld [vmem:[%s1] sm:$0xf]
    %51 = vset.pattern.permute.xlu0 0
    %52 = vperm.xlu0 %51, %v39
    %v53 = vpop.permute.xlu0 %52
    %56 = vset.pattern.permute.xlu0 0
    %57 = vperm.xlu0 %56, %v40
    %v58 = vpop.permute.xlu0 %57
    %61 = vset.pattern.permute.xlu0 0
    %62 = vperm.xlu0 %61, %v41
    %v63 = vpop.permute.xlu0 %62
    %66 = vset.pattern.permute.xlu0 0
    %67 = vperm.xlu0 %66, %v42
    %v68 = vpop.permute.xlu0 %67
    %71 = vset.pattern.permute.xlu0 0
    %72 = vperm.xlu0 %71, %v43
    %v73 = vpop.permute.xlu0 %72
    %76 = vset.pattern.permute.xlu0 0
    %77 = vperm.xlu0 %76, %v44
    %v78 = vpop.permute.xlu0 %77
    %81 = vset.pattern.permute.xlu0 0
    %82 = vperm.xlu0 %81, %v45
    %v83 = vpop.permute.xlu0 %82
    %86 = vset.pattern.permute.xlu0 0
    %87 = vperm.xlu0 %86, %v46
    %v88 = vpop.permute.xlu0 %87
    %91 = vset.pattern.permute.xlu0 0
    %92 = vperm.xlu0 %91, %v47
    %v93 = vpop.permute.xlu0 %92
    %96 = vset.pattern.permute.xlu0 0
    %97 = vperm.xlu0 %96, %v48
    %v98 = vpop.permute.xlu0 %97
    %v101 = vlaneseq
    %v102 = vshrl.u32 %v101, 7
    %v103 = vsub.s32 0, %v102
    %v104 = vrot.slane %v49, %v103
    %v105 = vlaneseq
    %v106 = vshrl.u32 %v105, 7
    %v107 = vsub.s32 1, %v106
    %v108 = vrot.slane %v49, %v107
    %v109 = vlaneseq
    %v110 = vshrl.u32 %v109, 7
    %v111 = vsub.s32 2, %v110
    %v112 = vrot.slane %v49, %v111
    %v113 = vlaneseq
    %v114 = vshrl.u32 %v113, 7
    %v115 = vsub.s32 3, %v114
    %v116 = vrot.slane %v49, %v115
    %v121 = vmul.f32 %v53, %v104
    %v122 = vmul.f32 %v53, %v108
    %v123 = vmul.f32 %v53, %v112
    %v124 = vmul.f32 %v53, %v116
    %v125 = vmul.f32 %v58, %v104
    %v126 = vmul.f32 %v58, %v108
    %v127 = vmul.f32 %v58, %v112
    %v128 = vmul.f32 %v58, %v116
    %v129 = vmul.f32 %v63, %v104
    %v130 = vmul.f32 %v63, %v108
    %v131 = vmul.f32 %v63, %v112
    %v132 = vmul.f32 %v63, %v116
    %v133 = vmul.f32 %v68, %v104
    %v134 = vmul.f32 %v68, %v108
    %v135 = vmul.f32 %v68, %v112
    %v136 = vmul.f32 %v68, %v116
    %v137 = vmul.f32 %v73, %v104
    %v138 = vmul.f32 %v73, %v108
    %v139 = vmul.f32 %v73, %v112
    %v140 = vmul.f32 %v73, %v116
    %v141 = vmul.f32 %v78, %v104
    %v142 = vmul.f32 %v78, %v108
    %v143 = vmul.f32 %v78, %v112
    %v144 = vmul.f32 %v78, %v116
    %v145 = vmul.f32 %v83, %v104
    %v146 = vmul.f32 %v83, %v108
    %v147 = vmul.f32 %v83, %v112
    %v148 = vmul.f32 %v83, %v116
    %v149 = vmul.f32 %v88, %v104
    %v150 = vmul.f32 %v88, %v108
    %v151 = vmul.f32 %v88, %v112
    %v152 = vmul.f32 %v88, %v116
    %v153 = vmul.f32 %v93, %v104
    %v154 = vmul.f32 %v93, %v108
    %v155 = vmul.f32 %v93, %v112
    %v156 = vmul.f32 %v93, %v116
    %v157 = vmul.f32 %v98, %v104
    %v158 = vmul.f32 %v98, %v108
    %v159 = vmul.f32 %v98, %v112
    %v160 = vmul.f32 %v98, %v116
    %v161 = vld [vmem:[%s3] sm:$0xf]
    %v163 = vlaneseq
    %v164 = vshrl.u32 %v163, 7
    %v165 = vsub.s32 0, %v164
    %v166 = vrot.slane %v161, %v165
    %v167 = vlaneseq
    %v168 = vshrl.u32 %v167, 7
    %v169 = vsub.s32 1, %v168
    %v170 = vrot.slane %v161, %v169
    %v171 = vlaneseq
    %v172 = vshrl.u32 %v171, 7
    %v173 = vsub.s32 2, %v172
    %v174 = vrot.slane %v161, %v173
    %v175 = vlaneseq
    %v176 = vshrl.u32 %v175, 7
    %v177 = vsub.s32 3, %v176
    %v178 = vrot.slane %v161, %v177
    %v183 = vadd.f32 %v121, %v166
    %v184 = vadd.f32 %v122, %v170
    %v185 = vadd.f32 %v123, %v174
    %v186 = vadd.f32 %v124, %v178
    %v187 = vadd.f32 %v125, %v166
    %v188 = vadd.f32 %v126, %v170
    %v189 = vadd.f32 %v127, %v174
    %v190 = vadd.f32 %v128, %v178
    %v191 = vadd.f32 %v129, %v166
    %v192 = vadd.f32 %v130, %v170
    %v193 = vadd.f32 %v131, %v174
    %v194 = vadd.f32 %v132, %v178
    %v195 = vadd.f32 %v133, %v166
    %v196 = vadd.f32 %v134, %v170
    %v197 = vadd.f32 %v135, %v174
    %v198 = vadd.f32 %v136, %v178
    %v199 = vadd.f32 %v137, %v166
    %v200 = vadd.f32 %v138, %v170
    %v201 = vadd.f32 %v139, %v174
    %v202 = vadd.f32 %v140, %v178
    %v203 = vadd.f32 %v141, %v166
    %v204 = vadd.f32 %v142, %v170
    %v205 = vadd.f32 %v143, %v174
    %v206 = vadd.f32 %v144, %v178
    %v207 = vadd.f32 %v145, %v166
    %v208 = vadd.f32 %v146, %v170
    %v209 = vadd.f32 %v147, %v174
    %v210 = vadd.f32 %v148, %v178
    %v211 = vadd.f32 %v149, %v166
    %v212 = vadd.f32 %v150, %v170
    %v213 = vadd.f32 %v151, %v174
    %v214 = vadd.f32 %v152, %v178
    %v215 = vadd.f32 %v153, %v166
    %v216 = vadd.f32 %v154, %v170
    %v217 = vadd.f32 %v155, %v174
    %v218 = vadd.f32 %v156, %v178
    %v219 = vadd.f32 %v157, %v166
    %v220 = vadd.f32 %v158, %v170
    %v221 = vadd.f32 %v159, %v174
    %v222 = vadd.f32 %v160, %v178
    %223 = vst [vmem:[#allocation2] sm:$0xff] %v183
    %224 = vst [vmem:[#allocation2 + $0x8] sm:$0xff] %v184
    %225 = vst [vmem:[#allocation2 + $0x10] sm:$0xff] %v185
    %226 = vst [vmem:[#allocation2 + $0x18] sm:$0xff] %v186
    %227 = vst [vmem:[#allocation2 + $0x20] sm:$0xff] %v187
    %228 = vst [vmem:[#allocation2 + $0x28] sm:$0xff] %v188
    %229 = vst [vmem:[#allocation2 + $0x30] sm:$0xff] %v189
    %230 = vst [vmem:[#allocation2 + $0x38] sm:$0xff] %v190
    %231 = vst [vmem:[#allocation2 + $0x40] sm:$0xff] %v191
    %232 = vst [vmem:[#allocation2 + $0x48] sm:$0xff] %v192
    %233 = vst [vmem:[#allocation2 + $0x50] sm:$0xff] %v193
    %234 = vst [vmem:[#allocation2 + $0x58] sm:$0xff] %v194
    %235 = vst [vmem:[#allocation2 + $0x60] sm:$0xff] %v195
    %236 = vst [vmem:[#allocation2 + $0x68] sm:$0xff] %v196
    %237 = vst [vmem:[#allocation2 + $0x70] sm:$0xff] %v197
    %238 = vst [vmem:[#allocation2 + $0x78] sm:$0xff] %v198
    %239 = vst [vmem:[#allocation2 + $0x80] sm:$0xff] %v199
    %240 = vst [vmem:[#allocation2 + $0x88] sm:$0xff] %v200
    %241 = vst [vmem:[#allocation2 + $0x90] sm:$0xff] %v201
    %242 = vst [vmem:[#allocation2 + $0x98] sm:$0xff] %v202
    %243 = vst [vmem:[#allocation2 + $0xa0] sm:$0xff] %v203
    %244 = vst [vmem:[#allocation2 + $0xa8] sm:$0xff] %v204
    %245 = vst [vmem:[#allocation2 + $0xb0] sm:$0xff] %v205
    %246 = vst [vmem:[#allocation2 + $0xb8] sm:$0xff] %v206
    %247 = vst [vmem:[#allocation2 + $0xc0] sm:$0xff] %v207
    %248 = vst [vmem:[#allocation2 + $0xc8] sm:$0xff] %v208
    %249 = vst [vmem:[#allocation2 + $0xd0] sm:$0xff] %v209
    %250 = vst [vmem:[#allocation2 + $0xd8] sm:$0xff] %v210
    %251 = vst [vmem:[#allocation2 + $0xe0] sm:$0xff] %v211
    %252 = vst [vmem:[#allocation2 + $0xe8] sm:$0xff] %v212
    %253 = vst [vmem:[#allocation2 + $0xf0] sm:$0xff] %v213
    %254 = vst [vmem:[#allocation2 + $0xf8] sm:$0xff] %v214
    %255 = vst [vmem:[#allocation2 + $0x100] sm:$0xff] %v215
    %256 = vst [vmem:[#allocation2 + $0x108] sm:$0xff] %v216
    %257 = vst [vmem:[#allocation2 + $0x110] sm:$0xff] %v217
    %258 = vst [vmem:[#allocation2 + $0x118] sm:$0xff] %v218
    %259 = vst [vmem:[#allocation2 + $0x120] sm:$0xff] %v219
    %260 = vst [vmem:[#allocation2 + $0x128] sm:$0xff] %v220
    %261 = vst [vmem:[#allocation2 + $0x130] sm:$0xff] %v221
    %262 = vst [vmem:[#allocation2 + $0x138] sm:$0xff] %v222
    %v263 = vld [vmem:[#allocation4] sm:$0xff]
    %v264 = vld [vmem:[#allocation4 + $0x8] sm:$0xff]
    %v265 = vld [vmem:[#allocation4 + $0x10] sm:$0xff]
    %v266 = vld [vmem:[#allocation4 + $0x18] sm:$0xff]
    %v267 = vld [vmem:[#allocation4 + $0x20] sm:$0xff]
    %v268 = vld [vmem:[#allocation4 + $0x28] sm:$0xff]
    %v269 = vld [vmem:[#allocation4 + $0x30] sm:$0xff]
    %v270 = vld [vmem:[#allocation4 + $0x38] sm:$0xff]
    %v271 = vld [vmem:[#allocation4 + $0x40] sm:$0xff]
    %v272 = vld [vmem:[#allocation4 + $0x48] sm:$0xff]
    %v273 = vld [vmem:[#allocation4 + $0x50] sm:$0xff]
    %v274 = vld [vmem:[#allocation4 + $0x58] sm:$0xff]
    %v275 = vld [vmem:[#allocation4 + $0x60] sm:$0xff]
    %v276 = vld [vmem:[#allocation4 + $0x68] sm:$0xff]
    %v277 = vld [vmem:[#allocation4 + $0x70] sm:$0xff]
    %v278 = vld [vmem:[#allocation4 + $0x78] sm:$0xff]
    %v279 = vld [vmem:[#allocation4 + $0x80] sm:$0xff]
    %v280 = vld [vmem:[#allocation4 + $0x88] sm:$0xff]
    %v281 = vld [vmem:[#allocation4 + $0x90] sm:$0xff]
    %v282 = vld [vmem:[#allocation4 + $0x98] sm:$0xff]
    %v283 = vld [vmem:[#allocation4 + $0xa0] sm:$0xff]
    %v284 = vld [vmem:[#allocation4 + $0xa8] sm:$0xff]
    %v285 = vld [vmem:[#allocation4 + $0xb0] sm:$0xff]
    %v286 = vld [vmem:[#allocation4 + $0xb8] sm:$0xff]
    %v287 = vld [vmem:[#allocation4 + $0xc0] sm:$0xff]
    %v288 = vld [vmem:[#allocation4 + $0xc8] sm:$0xff]
    %v289 = vld [vmem:[#allocation4 + $0xd0] sm:$0xff]
    %v290 = vld [vmem:[#allocation4 + $0xd8] sm:$0xff]
    %v291 = vld [vmem:[#allocation4 + $0xe0] sm:$0xff]
    %v292 = vld [vmem:[#allocation4 + $0xe8] sm:$0xff]
    %v293 = vld [vmem:[#allocation4 + $0xf0] sm:$0xff]
    %v294 = vld [vmem:[#allocation4 + $0xf8] sm:$0xff]
    %v295 = vld [vmem:[#allocation4 + $0x100] sm:$0xff]
    %v296 = vld [vmem:[#allocation4 + $0x108] sm:$0xff]
    %v297 = vld [vmem:[#allocation4 + $0x110] sm:$0xff]
    %v298 = vld [vmem:[#allocation4 + $0x118] sm:$0xff]
    %v299 = vld [vmem:[#allocation4 + $0x120] sm:$0xff]
    %v300 = vld [vmem:[#allocation4 + $0x128] sm:$0xff]
    %v301 = vld [vmem:[#allocation4 + $0x130] sm:$0xff]
    %v302 = vld [vmem:[#allocation4 + $0x138] sm:$0xff]
    %v303 = vld [vmem:[#allocation4 + $0x140] sm:$0xff]
    %v304 = vld [vmem:[#allocation4 + $0x148] sm:$0xff]
    %v305 = vld [vmem:[#allocation4 + $0x150] sm:$0xff]
    %v306 = vld [vmem:[#allocation4 + $0x158] sm:$0xff]
    %v307 = vld [vmem:[#allocation4 + $0x160] sm:$0xff]
    %v308 = vld [vmem:[#allocation4 + $0x168] sm:$0xff]
    %v309 = vld [vmem:[#allocation4 + $0x170] sm:$0xff]
    %v310 = vld [vmem:[#allocation4 + $0x178] sm:$0xff]
    %v311 = vld [vmem:[#allocation4 + $0x180] sm:$0xff]
    %v312 = vld [vmem:[#allocation4 + $0x188] sm:$0xff]
    %v313 = vld [vmem:[#allocation4 + $0x190] sm:$0xff]
    %v314 = vld [vmem:[#allocation4 + $0x198] sm:$0xff]
    %v315 = vld [vmem:[#allocation4 + $0x1a0] sm:$0xff]
    %v316 = vld [vmem:[#allocation4 + $0x1a8] sm:$0xff]
    %v317 = vld [vmem:[#allocation4 + $0x1b0] sm:$0xff]
    %v318 = vld [vmem:[#allocation4 + $0x1b8] sm:$0xff]
    %v319 = vld [vmem:[#allocation4 + $0x1c0] sm:$0xff]
    %v320 = vld [vmem:[#allocation4 + $0x1c8] sm:$0xff]
    %v321 = vld [vmem:[#allocation4 + $0x1d0] sm:$0xff]
    %v322 = vld [vmem:[#allocation4 + $0x1d8] sm:$0xff]
    %v323 = vld [vmem:[#allocation4 + $0x1e0] sm:$0xff]
    %v324 = vld [vmem:[#allocation4 + $0x1e8] sm:$0xff]
    %v325 = vld [vmem:[#allocation4 + $0x1f0] sm:$0xff]
    %v326 = vld [vmem:[#allocation4 + $0x1f8] sm:$0xff]
    %v327 = vld [vmem:[#allocation2] sm:$0xff]
    %v328 = vld [vmem:[#allocation2 + $0x10] sm:$0xff]
    %v329 = vld [vmem:[#allocation2 + $0x18] sm:$0xff]
    %v330 = vxor.u32 %v327, 2147483648
    %v331 = vmul.f32 %v330, 1.442695
    %v332 = vpow.pop %v331
    %v333 = vadd.f32 %v332, 1.0
    %v334 = vrcp.pop %v333
    %v335 = vmul.f32 1.0, %v334
    %v336 = vmax.f32 %v328, 0.0
    %v337 = vxor.u32 %v329, 2147483648
    %v338 = vmul.f32 %v337, 1.442695
    %v339 = vpow.pop %v338
    %v340 = vadd.f32 %v339, 1.0
    %v341 = vrcp.pop %v340
    %v342 = vmul.f32 1.0, %v341
    %v343 = vmul.f32 %v335, %v336
    %v344 = vmax.f32 %v343, 0.0
    %v345 = vmul.f32 %v342, %v344
    %s346 = scalar_lea.vmem [#allocation2], 32
    %v347 = vld [vmem:[%s346] sm:$0xff]
    %v348 = vld [vmem:[%s346 + $0x8] sm:$0xff]
    %v349 = vld [vmem:[%s346 + $0x10] sm:$0xff]
    %v350 = vld [vmem:[%s346 + $0x18] sm:$0xff]
    %351 = vmatprep.subr.mxu0 %v324
    %352 = vmatpush1.msra.mxu0 %v323
    %353 = vmatprep.subr.mxu0 %v320
    %354 = vmatpush1.msra.mxu0 %v319
    %355 = vmatprep.subr.mxu0 %v316
    %356 = vmatpush1.msra.mxu0 %v315
    %357 = vmatprep.subr.mxu0 %v312
    %358 = vmatpush1.msra.mxu0 %v311
    %359 = vmatprep.subr.mxu0 %v308
    %360 = vmatpush1.msra.mxu0 %v307
    %361 = vmatprep.subr.mxu0 %v304
    %362 = vmatpush1.msra.mxu0 %v303
    %363 = vmatprep.subr.mxu0 %v300
    %364 = vmatpush1.msra.mxu0 %v299
    %365 = vmatprep.subr.mxu0 %v296
    %366 = vmatpush1.msra.mxu0 %v295
    %367 = vmatprep.subr.mxu0 %v292
    %368 = vmatpush1.msra.mxu0 %v291
    %369 = vmatprep.subr.mxu0 %v288
    %370 = vmatpush1.msra.mxu0 %v287
    %371 = vmatprep.subr.mxu0 %v284
    %372 = vmatpush1.msra.mxu0 %v283
    %373 = vmatprep.subr.mxu0 %v280
    %374 = vmatpush1.msra.mxu0 %v279
    %375 = vmatprep.subr.mxu0 %v276
    %376 = vmatpush1.msra.mxu0 %v275
    %377 = vmatprep.subr.mxu0 %v272
    %378 = vmatpush1.msra.mxu0 %v271
    %379 = vmatprep.subr.mxu0 %v268
    %380 = vmatpush1.msra.mxu0 %v267
    %381 = vmatprep.subr.mxu0 %v264
    %382 = vmatpush1.msra.mxu0 %v263
    %383 = vmatprep.subr.mxu0 0.0
    %384 = vmatpush2.msra.mxu0 0.0
    %385 = vmatprep.subr.mxu0 0.0
    %386 = vmatpush2.msra.mxu0 0.0
    %387 = vmatprep.subr.mxu0 0.0
    %388 = vmatpush2.msra.mxu0 0.0
    %389 = vmatprep.subr.mxu0 0.0
    %390 = vmatpush2.msra.mxu0 0.0
    %391 = vmatprep.subr.mxu0 0.0
    %392 = vmatpush2.msra.mxu0 0.0
    %393 = vmatprep.subr.mxu0 0.0
    %394 = vmatpush2.msra.mxu0 0.0
    %395 = vmatprep.subr.mxu0 0.0
    %396 = vmatpush2.msra.mxu0 0.0
    %397 = vmatprep.subr.mxu0 0.0
    %398 = vmatpush2.msra.mxu0 0.0
    %399 = vmatprep.subr.mxu0 0.0
    %400 = vmatpush2.msra.mxu0 0.0
    %401 = vmatprep.subr.mxu0 0.0
    %402 = vmatpush2.msra.mxu0 0.0
    %403 = vmatprep.subr.mxu0 0.0
    %404 = vmatpush2.msra.mxu0 0.0
    %405 = vmatprep.subr.mxu0 0.0
    %406 = vmatpush2.msra.mxu0 0.0
    %407 = vmatprep.subr.mxu0 0.0
    %408 = vmatpush2.msra.mxu0 0.0
    %409 = vmatprep.subr.mxu0 0.0
    %410 = vmatpush2.msra.mxu0 0.0
    %411 = vmatprep.subr.mxu0 0.0
    %412 = vmatpush2.msra.mxu0 0.0
    %413 = vmatprep.subr.mxu0 0.0
    %414 = vmatpush2.msra.mxu0 0.0
    %415 = vmatprep.mubr.f32.mxu0 0.0
    %416 = vmatmul.mubr.f32.gmra.mxu0 %v345
    %v417 = vpop.f32.mrf.mxu0
    %v418 = vadd.f32 0.0, %v417
    %v419 = vpop.f32.mrf.mxu0
    %v420 = vadd.f32 0.0, %v419
    %421 = vdwg.mxu0
    %422 = vmatprep.subr.mxu0 %v326
    %423 = vmatpush1.msra.mxu0 %v325
    %424 = vmatprep.subr.mxu0 %v322
    %425 = vmatpush1.msra.mxu0 %v321
    %426 = vmatprep.subr.mxu0 %v318
    %427 = vmatpush1.msra.mxu0 %v317
    %428 = vmatprep.subr.mxu0 %v314
    %429 = vmatpush1.msra.mxu0 %v313
    %430 = vmatprep.subr.mxu0 %v310
    %431 = vmatpush1.msra.mxu0 %v309
    %432 = vmatprep.subr.mxu0 %v306
    %433 = vmatpush1.msra.mxu0 %v305
    %434 = vmatprep.subr.mxu0 %v302
    %435 = vmatpush1.msra.mxu0 %v301
    %436 = vmatprep.subr.mxu0 %v298
    %437 = vmatpush1.msra.mxu0 %v297
    %438 = vmatprep.subr.mxu0 %v294
    %439 = vmatpush1.msra.mxu0 %v293
    %440 = vmatprep.subr.mxu0 %v290
    %441 = vmatpush1.msra.mxu0 %v289
    %442 = vmatprep.subr.mxu0 %v286
    %443 = vmatpush1.msra.mxu0 %v285
    %444 = vmatprep.subr.mxu0 %v282
    %445 = vmatpush1.msra.mxu0 %v281
    %446 = vmatprep.subr.mxu0 %v278
    %447 = vmatpush1.msra.mxu0 %v277
    %448 = vmatprep.subr.mxu0 %v274
    %449 = vmatpush1.msra.mxu0 %v273
    %450 = vmatprep.subr.mxu0 %v270
    %451 = vmatpush1.msra.mxu0 %v269
    %452 = vmatprep.subr.mxu0 %v266
    %453 = vmatpush1.msra.mxu0 %v265
    %454 = vmatprep.subr.mxu0 0.0
    %455 = vmatpush2.msra.mxu0 0.0
    %456 = vmatprep.subr.mxu0 0.0
    %457 = vmatpush2.msra.mxu0 0.0
    %458 = vmatprep.subr.mxu0 0.0
    %459 = vmatpush2.msra.mxu0 0.0
    %460 = vmatprep.subr.mxu0 0.0
    %461 = vmatpush2.msra.mxu0 0.0
    %462 = vmatprep.subr.mxu0 0.0
    %463 = vmatpush2.msra.mxu0 0.0
    %464 = vmatprep.subr.mxu0 0.0
    %465 = vmatpush2.msra.mxu0 0.0
    %466 = vmatprep.subr.mxu0 0.0
    %467 = vmatpush2.msra.mxu0 0.0
    %468 = vmatprep.subr.mxu0 0.0
    %469 = vmatpush2.msra.mxu0 0.0
    %470 = vmatprep.subr.mxu0 0.0
    %471 = vmatpush2.msra.mxu0 0.0
    %472 = vmatprep.subr.mxu0 0.0
    %473 = vmatpush2.msra.mxu0 0.0
    %474 = vmatprep.subr.mxu0 0.0
    %475 = vmatpush2.msra.mxu0 0.0
    %476 = vmatprep.subr.mxu0 0.0
    %477 = vmatpush2.msra.mxu0 0.0
    %478 = vmatprep.subr.mxu0 0.0
    %479 = vmatpush2.msra.mxu0 0.0
    %480 = vmatprep.subr.mxu0 0.0
    %481 = vmatpush2.msra.mxu0 0.0
    %482 = vmatprep.subr.mxu0 0.0
    %483 = vmatpush2.msra.mxu0 0.0
    %484 = vmatprep.subr.mxu0 0.0
    %485 = vmatpush2.msra.mxu0 0.0
    %486 = vmatprep.mubr.f32.mxu0 0.0
    %487 = vmatmul.mubr.f32.gmra.mxu0 %v345
    %v488 = vpop.f32.mrf.mxu0
    %v489 = vadd.f32 0.0, %v488
    %v490 = vpop.f32.mrf.mxu0
    %v491 = vadd.f32 0.0, %v490
    %492 = vdwg.mxu0
    %v493 = vadd.f32 %v347, %v418
    %v494 = vadd.f32 %v348, %v420
    %v495 = vadd.f32 %v349, %v489
    %v496 = vadd.f32 %v350, %v491
    %v497 = vxor.u32 %v493, 2147483648
    %v498 = vmul.f32 %v497, 1.442695
    %v499 = vpow.pop %v498
    %v500 = vadd.f32 %v499, 1.0
    %v501 = vrcp.pop %v500
    %v502 = vmul.f32 1.0, %v501
    %v503 = vxor.u32 %v494, 2147483648
    %v504 = vmul.f32 %v503, 1.442695
    %v505 = vpow.pop %v504
    %v506 = vadd.f32 %v505, 1.0
    %v507 = vrcp.pop %v506
    %v508 = vmul.f32 1.0, %v507
    %v509 = vmax.f32 %v495, 0.0
    %v510 = vxor.u32 %v496, 2147483648
    %v511 = vmul.f32 %v510, 1.442695
    %v512 = vpow.pop %v511
    %v513 = vadd.f32 %v512, 1.0
    %v514 = vrcp.pop %v513
    %v515 = vmul.f32 1.0, %v514
    %v516 = vmul.f32 %v508, %v343
    %v517 = vmul.f32 %v502, %v509
    %v518 = vadd.f32 %v516, %v517
    %v519 = vmax.f32 %v518, 0.0
    %v520 = vmul.f32 %v515, %v519
    %s521 = scalar_lea.vmem [#allocation2], 64
    %v522 = vld [vmem:[%s521] sm:$0xff]
    %v523 = vld [vmem:[%s521 + $0x8] sm:$0xff]
    %v524 = vld [vmem:[%s521 + $0x10] sm:$0xff]
    %v525 = vld [vmem:[%s521 + $0x18] sm:$0xff]
    %526 = vmatprep.subr.mxu0 %v324
    %527 = vmatpush1.msra.mxu0 %v323
    %528 = vmatprep.subr.mxu0 %v320
    %529 = vmatpush1.msra.mxu0 %v319
    %530 = vmatprep.subr.mxu0 %v316
    %531 = vmatpush1.msra.mxu0 %v315
    %532 = vmatprep.subr.mxu0 %v312
    %533 = vmatpush1.msra.mxu0 %v311
    %534 = vmatprep.subr.mxu0 %v308
    %535 = vmatpush1.msra.mxu0 %v307
    %536 = vmatprep.subr.mxu0 %v304
    %537 = vmatpush1.msra.mxu0 %v303
    %538 = vmatprep.subr.mxu0 %v300
    %539 = vmatpush1.msra.mxu0 %v299
    %540 = vmatprep.subr.mxu0 %v296
    %541 = vmatpush1.msra.mxu0 %v295
    %542 = vmatprep.subr.mxu0 %v292
    %543 = vmatpush1.msra.mxu0 %v291
    %544 = vmatprep.subr.mxu0 %v288
    %545 = vmatpush1.msra.mxu0 %v287
    %546 = vmatprep.subr.mxu0 %v284
    %547 = vmatpush1.msra.mxu0 %v283
    %548 = vmatprep.subr.mxu0 %v280
    %549 = vmatpush1.msra.mxu0 %v279
    %550 = vmatprep.subr.mxu0 %v276
    %551 = vmatpush1.msra.mxu0 %v275
    %552 = vmatprep.subr.mxu0 %v272
    %553 = vmatpush1.msra.mxu0 %v271
    %554 = vmatprep.subr.mxu0 %v268
    %555 = vmatpush1.msra.mxu0 %v267
    %556 = vmatprep.subr.mxu0 %v264
    %557 = vmatpush1.msra.mxu0 %v263
    %558 = vmatprep.subr.mxu0 0.0
    %559 = vmatpush2.msra.mxu0 0.0
    %560 = vmatprep.subr.mxu0 0.0
    %561 = vmatpush2.msra.mxu0 0.0
    %562 = vmatprep.subr.mxu0 0.0
    %563 = vmatpush2.msra.mxu0 0.0
    %564 = vmatprep.subr.mxu0 0.0
    %565 = vmatpush2.msra.mxu0 0.0
    %566 = vmatprep.subr.mxu0 0.0
    %567 = vmatpush2.msra.mxu0 0.0
    %568 = vmatprep.subr.mxu0 0.0
    %569 = vmatpush2.msra.mxu0 0.0
    %570 = vmatprep.subr.mxu0 0.0
    %571 = vmatpush2.msra.mxu0 0.0
    %572 = vmatprep.subr.mxu0 0.0
    %573 = vmatpush2.msra.mxu0 0.0
    %574 = vmatprep.subr.mxu0 0.0
    %575 = vmatpush2.msra.mxu0 0.0
    %576 = vmatprep.subr.mxu0 0.0
    %577 = vmatpush2.msra.mxu0 0.0
    %578 = vmatprep.subr.mxu0 0.0
    %579 = vmatpush2.msra.mxu0 0.0
    %580 = vmatprep.subr.mxu0 0.0
    %581 = vmatpush2.msra.mxu0 0.0
    %582 = vmatprep.subr.mxu0 0.0
    %583 = vmatpush2.msra.mxu0 0.0
    %584 = vmatprep.subr.mxu0 0.0
    %585 = vmatpush2.msra.mxu0 0.0
    %586 = vmatprep.subr.mxu0 0.0
    %587 = vmatpush2.msra.mxu0 0.0
    %588 = vmatprep.subr.mxu0 0.0
    %589 = vmatpush2.msra.mxu0 0.0
    %590 = vmatprep.mubr.f32.mxu0 0.0
    %591 = vmatmul.mubr.f32.gmra.mxu0 %v520
    %v592 = vpop.f32.mrf.mxu0
    %v593 = vadd.f32 0.0, %v592
    %v594 = vpop.f32.mrf.mxu0
    %v595 = vadd.f32 0.0, %v594
    %596 = vdwg.mxu0
    %597 = vmatprep.subr.mxu0 %v326
    %598 = vmatpush1.msra.mxu0 %v325
    %599 = vmatprep.subr.mxu0 %v322
    %600 = vmatpush1.msra.mxu0 %v321
    %601 = vmatprep.subr.mxu0 %v318
    %602 = vmatpush1.msra.mxu0 %v317
    %603 = vmatprep.subr.mxu0 %v314
    %604 = vmatpush1.msra.mxu0 %v313
    %605 = vmatprep.subr.mxu0 %v310
    %606 = vmatpush1.msra.mxu0 %v309
    %607 = vmatprep.subr.mxu0 %v306
    %608 = vmatpush1.msra.mxu0 %v305
    %609 = vmatprep.subr.mxu0 %v302
    %610 = vmatpush1.msra.mxu0 %v301
    %611 = vmatprep.subr.mxu0 %v298
    %612 = vmatpush1.msra.mxu0 %v297
    %613 = vmatprep.subr.mxu0 %v294
    %614 = vmatpush1.msra.mxu0 %v293
    %615 = vmatprep.subr.mxu0 %v290
    %616 = vmatpush1.msra.mxu0 %v289
    %617 = vmatprep.subr.mxu0 %v286
    %618 = vmatpush1.msra.mxu0 %v285
    %619 = vmatprep.subr.mxu0 %v282
    %620 = vmatpush1.msra.mxu0 %v281
    %621 = vmatprep.subr.mxu0 %v278
    %622 = vmatpush1.msra.mxu0 %v277
    %623 = vmatprep.subr.mxu0 %v274
    %624 = vmatpush1.msra.mxu0 %v273
    %625 = vmatprep.subr.mxu0 %v270
    %626 = vmatpush1.msra.mxu0 %v269
    %627 = vmatprep.subr.mxu0 %v266
    %628 = vmatpush1.msra.mxu0 %v265
    %629 = vmatprep.subr.mxu0 0.0
    %630 = vmatpush2.msra.mxu0 0.0
    %631 = vmatprep.subr.mxu0 0.0
    %632 = vmatpush2.msra.mxu0 0.0
    %633 = vmatprep.subr.mxu0 0.0
    %634 = vmatpush2.msra.mxu0 0.0
    %635 = vmatprep.subr.mxu0 0.0
    %636 = vmatpush2.msra.mxu0 0.0
    %637 = vmatprep.subr.mxu0 0.0
    %638 = vmatpush2.msra.mxu0 0.0
    %639 = vmatprep.subr.mxu0 0.0
    %640 = vmatpush2.msra.mxu0 0.0
    %641 = vmatprep.subr.mxu0 0.0
    %642 = vmatpush2.msra.mxu0 0.0
    %643 = vmatprep.subr.mxu0 0.0
    %644 = vmatpush2.msra.mxu0 0.0
    %645 = vmatprep.subr.mxu0 0.0
    %646 = vmatpush2.msra.mxu0 0.0
    %647 = vmatprep.subr.mxu0 0.0
    %648 = vmatpush2.msra.mxu0 0.0
    %649 = vmatprep.subr.mxu0 0.0
    %650 = vmatpush2.msra.mxu0 0.0
    %651 = vmatprep.subr.mxu0 0.0
    %652 = vmatpush2.msra.mxu0 0.0
    %653 = vmatprep.subr.mxu0 0.0
    %654 = vmatpush2.msra.mxu0 0.0
    %655 = vmatprep.subr.mxu0 0.0
    %656 = vmatpush2.msra.mxu0 0.0
    %657 = vmatprep.subr.mxu0 0.0
    %658 = vmatpush2.msra.mxu0 0.0
    %659 = vmatprep.subr.mxu0 0.0
    %660 = vmatpush2.msra.mxu0 0.0
    %661 = vmatprep.mubr.f32.mxu0 0.0
    %662 = vmatmul.mubr.f32.gmra.mxu0 %v520
    %v663 = vpop.f32.mrf.mxu0
    %v664 = vadd.f32 0.0, %v663
    %v665 = vpop.f32.mrf.mxu0
    %v666 = vadd.f32 0.0, %v665
    %667 = vdwg.mxu0
    %v668 = vadd.f32 %v522, %v593
    %v669 = vadd.f32 %v523, %v595
    %v670 = vadd.f32 %v524, %v664
    %v671 = vadd.f32 %v525, %v666
    %v672 = vxor.u32 %v668, 2147483648
    %v673 = vmul.f32 %v672, 1.442695
    %v674 = vpow.pop %v673
    %v675 = vadd.f32 %v674, 1.0
    %v676 = vrcp.pop %v675
    %v677 = vmul.f32 1.0, %v676
    %v678 = vxor.u32 %v669, 2147483648
    %v679 = vmul.f32 %v678, 1.442695
    %v680 = vpow.pop %v679
    %v681 = vadd.f32 %v680, 1.0
    %v682 = vrcp.pop %v681
    %v683 = vmul.f32 1.0, %v682
    %v684 = vmax.f32 %v670, 0.0
    %v685 = vxor.u32 %v671, 2147483648
    %v686 = vmul.f32 %v685, 1.442695
    %v687 = vpow.pop %v686
    %v688 = vadd.f32 %v687, 1.0
    %v689 = vrcp.pop %v688
    %v690 = vmul.f32 1.0, %v689
    %v691 = vmul.f32 %v683, %v518
    %v692 = vmul.f32 %v677, %v684
    %v693 = vadd.f32 %v691, %v692
    %v694 = vmax.f32 %v693, 0.0
    %v695 = vmul.f32 %v690, %v694
    %s696 = scalar_lea.vmem [#allocation2], 96
    %v697 = vld [vmem:[%s696] sm:$0xff]
    %v698 = vld [vmem:[%s696 + $0x8] sm:$0xff]
    %v699 = vld [vmem:[%s696 + $0x10] sm:$0xff]
    %v700 = vld [vmem:[%s696 + $0x18] sm:$0xff]
    %701 = vmatprep.subr.mxu0 %v324
    %702 = vmatpush1.msra.mxu0 %v323
    %703 = vmatprep.subr.mxu0 %v320
    %704 = vmatpush1.msra.mxu0 %v319
    %705 = vmatprep.subr.mxu0 %v316
    %706 = vmatpush1.msra.mxu0 %v315
    %707 = vmatprep.subr.mxu0 %v312
    %708 = vmatpush1.msra.mxu0 %v311
    %709 = vmatprep.subr.mxu0 %v308
    %710 = vmatpush1.msra.mxu0 %v307
    %711 = vmatprep.subr.mxu0 %v304
    %712 = vmatpush1.msra.mxu0 %v303
    %713 = vmatprep.subr.mxu0 %v300
    %714 = vmatpush1.msra.mxu0 %v299
    %715 = vmatprep.subr.mxu0 %v296
    %716 = vmatpush1.msra.mxu0 %v295
    %717 = vmatprep.subr.mxu0 %v292
    %718 = vmatpush1.msra.mxu0 %v291
    %719 = vmatprep.subr.mxu0 %v288
    %720 = vmatpush1.msra.mxu0 %v287
    %721 = vmatprep.subr.mxu0 %v284
    %722 = vmatpush1.msra.mxu0 %v283
    %723 = vmatprep.subr.mxu0 %v280
    %724 = vmatpush1.msra.mxu0 %v279
    %725 = vmatprep.subr.mxu0 %v276
    %726 = vmatpush1.msra.mxu0 %v275
    %727 = vmatprep.subr.mxu0 %v272
    %728 = vmatpush1.msra.mxu0 %v271
    %729 = vmatprep.subr.mxu0 %v268
    %730 = vmatpush1.msra.mxu0 %v267
    %731 = vmatprep.subr.mxu0 %v264
    %732 = vmatpush1.msra.mxu0 %v263
    %733 = vmatprep.subr.mxu0 0.0
    %734 = vmatpush2.msra.mxu0 0.0
    %735 = vmatprep.subr.mxu0 0.0
    %736 = vmatpush2.msra.mxu0 0.0
    %737 = vmatprep.subr.mxu0 0.0
    %738 = vmatpush2.msra.mxu0 0.0
    %739 = vmatprep.subr.mxu0 0.0
    %740 = vmatpush2.msra.mxu0 0.0
    %741 = vmatprep.subr.mxu0 0.0
    %742 = vmatpush2.msra.mxu0 0.0
    %743 = vmatprep.subr.mxu0 0.0
    %744 = vmatpush2.msra.mxu0 0.0
    %745 = vmatprep.subr.mxu0 0.0
    %746 = vmatpush2.msra.mxu0 0.0
    %747 = vmatprep.subr.mxu0 0.0
    %748 = vmatpush2.msra.mxu0 0.0
    %749 = vmatprep.subr.mxu0 0.0
    %750 = vmatpush2.msra.mxu0 0.0
    %751 = vmatprep.subr.mxu0 0.0
    %752 = vmatpush2.msra.mxu0 0.0
    %753 = vmatprep.subr.mxu0 0.0
    %754 = vmatpush2.msra.mxu0 0.0
    %755 = vmatprep.subr.mxu0 0.0
    %756 = vmatpush2.msra.mxu0 0.0
    %757 = vmatprep.subr.mxu0 0.0
    %758 = vmatpush2.msra.mxu0 0.0
    %759 = vmatprep.subr.mxu0 0.0
    %760 = vmatpush2.msra.mxu0 0.0
    %761 = vmatprep.subr.mxu0 0.0
    %762 = vmatpush2.msra.mxu0 0.0
    %763 = vmatprep.subr.mxu0 0.0
    %764 = vmatpush2.msra.mxu0 0.0
    %765 = vmatprep.mubr.f32.mxu0 0.0
    %766 = vmatmul.mubr.f32.gmra.mxu0 %v695
    %v767 = vpop.f32.mrf.mxu0
    %v768 = vadd.f32 0.0, %v767
    %v769 = vpop.f32.mrf.mxu0
    %v770 = vadd.f32 0.0, %v769
    %771 = vdwg.mxu0
    %772 = vmatprep.subr.mxu0 %v326
    %773 = vmatpush1.msra.mxu0 %v325
    %774 = vmatprep.subr.mxu0 %v322
    %775 = vmatpush1.msra.mxu0 %v321
    %776 = vmatprep.subr.mxu0 %v318
    %777 = vmatpush1.msra.mxu0 %v317
    %778 = vmatprep.subr.mxu0 %v314
    %779 = vmatpush1.msra.mxu0 %v313
    %780 = vmatprep.subr.mxu0 %v310
    %781 = vmatpush1.msra.mxu0 %v309
    %782 = vmatprep.subr.mxu0 %v306
    %783 = vmatpush1.msra.mxu0 %v305
    %784 = vmatprep.subr.mxu0 %v302
    %785 = vmatpush1.msra.mxu0 %v301
    %786 = vmatprep.subr.mxu0 %v298
    %787 = vmatpush1.msra.mxu0 %v297
    %788 = vmatprep.subr.mxu0 %v294
    %789 = vmatpush1.msra.mxu0 %v293
    %790 = vmatprep.subr.mxu0 %v290
    %791 = vmatpush1.msra.mxu0 %v289
    %792 = vmatprep.subr.mxu0 %v286
    %793 = vmatpush1.msra.mxu0 %v285
    %794 = vmatprep.subr.mxu0 %v282
    %795 = vmatpush1.msra.mxu0 %v281
    %796 = vmatprep.subr.mxu0 %v278
    %797 = vmatpush1.msra.mxu0 %v277
    %798 = vmatprep.subr.mxu0 %v274
    %799 = vmatpush1.msra.mxu0 %v273
    %800 = vmatprep.subr.mxu0 %v270
    %801 = vmatpush1.msra.mxu0 %v269
    %802 = vmatprep.subr.mxu0 %v266
    %803 = vmatpush1.msra.mxu0 %v265
    %804 = vmatprep.subr.mxu0 0.0
    %805 = vmatpush2.msra.mxu0 0.0
    %806 = vmatprep.subr.mxu0 0.0
    %807 = vmatpush2.msra.mxu0 0.0
    %808 = vmatprep.subr.mxu0 0.0
    %809 = vmatpush2.msra.mxu0 0.0
    %810 = vmatprep.subr.mxu0 0.0
    %811 = vmatpush2.msra.mxu0 0.0
    %812 = vmatprep.subr.mxu0 0.0
    %813 = vmatpush2.msra.mxu0 0.0
    %814 = vmatprep.subr.mxu0 0.0
    %815 = vmatpush2.msra.mxu0 0.0
    %816 = vmatprep.subr.mxu0 0.0
    %817 = vmatpush2.msra.mxu0 0.0
    %818 = vmatprep.subr.mxu0 0.0
    %819 = vmatpush2.msra.mxu0 0.0
    %820 = vmatprep.subr.mxu0 0.0
    %821 = vmatpush2.msra.mxu0 0.0
    %822 = vmatprep.subr.mxu0 0.0
    %823 = vmatpush2.msra.mxu0 0.0
    %824 = vmatprep.subr.mxu0 0.0
    %825 = vmatpush2.msra.mxu0 0.0
    %826 = vmatprep.subr.mxu0 0.0
    %827 = vmatpush2.msra.mxu0 0.0
    %828 = vmatprep.subr.mxu0 0.0
    %829 = vmatpush2.msra.mxu0 0.0
    %830 = vmatprep.subr.mxu0 0.0
    %831 = vmatpush2.msra.mxu0 0.0
    %832 = vmatprep.subr.mxu0 0.0
    %833 = vmatpush2.msra.mxu0 0.0
    %834 = vmatprep.subr.mxu0 0.0
    %835 = vmatpush2.msra.mxu0 0.0
    %836 = vmatprep.mubr.f32.mxu0 0.0
    %837 = vmatmul.mubr.f32.gmra.mxu0 %v695
    %v838 = vpop.f32.mrf.mxu0
    %v839 = vadd.f32 0.0, %v838
    %v840 = vpop.f32.mrf.mxu0
    %v841 = vadd.f32 0.0, %v840
    %842 = vdwg.mxu0
    %v843 = vadd.f32 %v697, %v768
    %v844 = vadd.f32 %v698, %v770
    %v845 = vadd.f32 %v699, %v839
    %v846 = vadd.f32 %v700, %v841
    %v847 = vxor.u32 %v843, 2147483648
    %v848 = vmul.f32 %v847, 1.442695
    %v849 = vpow.pop %v848
    %v850 = vadd.f32 %v849, 1.0
    %v851 = vrcp.pop %v850
    %v852 = vmul.f32 1.0, %v851
    %v853 = vxor.u32 %v844, 2147483648
    %v854 = vmul.f32 %v853, 1.442695
    %v855 = vpow.pop %v854
    %v856 = vadd.f32 %v855, 1.0
    %v857 = vrcp.pop %v856
    %v858 = vmul.f32 1.0, %v857
    %v859 = vmax.f32 %v845, 0.0
    %v860 = vxor.u32 %v846, 2147483648
    %v861 = vmul.f32 %v860, 1.442695
    %v862 = vpow.pop %v861
    %v863 = vadd.f32 %v862, 1.0
    %v864 = vrcp.pop %v863
    %v865 = vmul.f32 1.0, %v864
    %v866 = vmul.f32 %v858, %v693
    %v867 = vmul.f32 %v852, %v859
    %v868 = vadd.f32 %v866, %v867
    %v869 = vmax.f32 %v868, 0.0
    %v870 = vmul.f32 %v865, %v869
    %s871 = scalar_lea.vmem [#allocation2], 128
    %v872 = vld [vmem:[%s871] sm:$0xff]
    %v873 = vld [vmem:[%s871 + $0x8] sm:$0xff]
    %v874 = vld [vmem:[%s871 + $0x10] sm:$0xff]
    %v875 = vld [vmem:[%s871 + $0x18] sm:$0xff]
    %876 = vmatprep.subr.mxu0 %v324
    %877 = vmatpush1.msra.mxu0 %v323
    %878 = vmatprep.subr.mxu0 %v320
    %879 = vmatpush1.msra.mxu0 %v319
    %880 = vmatprep.subr.mxu0 %v316
    %881 = vmatpush1.msra.mxu0 %v315
    %882 = vmatprep.subr.mxu0 %v312
    %883 = vmatpush1.msra.mxu0 %v311
    %884 = vmatprep.subr.mxu0 %v308
    %885 = vmatpush1.msra.mxu0 %v307
    %886 = vmatprep.subr.mxu0 %v304
    %887 = vmatpush1.msra.mxu0 %v303
    %888 = vmatprep.subr.mxu0 %v300
    %889 = vmatpush1.msra.mxu0 %v299
    %890 = vmatprep.subr.mxu0 %v296
    %891 = vmatpush1.msra.mxu0 %v295
    %892 = vmatprep.subr.mxu0 %v292
    %893 = vmatpush1.msra.mxu0 %v291
    %894 = vmatprep.subr.mxu0 %v288
    %895 = vmatpush1.msra.mxu0 %v287
    %896 = vmatprep.subr.mxu0 %v284
    %897 = vmatpush1.msra.mxu0 %v283
    %898 = vmatprep.subr.mxu0 %v280
    %899 = vmatpush1.msra.mxu0 %v279
    %900 = vmatprep.subr.mxu0 %v276
    %901 = vmatpush1.msra.mxu0 %v275
    %902 = vmatprep.subr.mxu0 %v272
    %903 = vmatpush1.msra.mxu0 %v271
    %904 = vmatprep.subr.mxu0 %v268
    %905 = vmatpush1.msra.mxu0 %v267
    %906 = vmatprep.subr.mxu0 %v264
    %907 = vmatpush1.msra.mxu0 %v263
    %908 = vmatprep.subr.mxu0 0.0
    %909 = vmatpush2.msra.mxu0 0.0
    %910 = vmatprep.subr.mxu0 0.0
    %911 = vmatpush2.msra.mxu0 0.0
    %912 = vmatprep.subr.mxu0 0.0
    %913 = vmatpush2.msra.mxu0 0.0
    %914 = vmatprep.subr.mxu0 0.0
    %915 = vmatpush2.msra.mxu0 0.0
    %916 = vmatprep.subr.mxu0 0.0
    %917 = vmatpush2.msra.mxu0 0.0
    %918 = vmatprep.subr.mxu0 0.0
    %919 = vmatpush2.msra.mxu0 0.0
    %920 = vmatprep.subr.mxu0 0.0
    %921 = vmatpush2.msra.mxu0 0.0
    %922 = vmatprep.subr.mxu0 0.0
    %923 = vmatpush2.msra.mxu0 0.0
    %924 = vmatprep.subr.mxu0 0.0
    %925 = vmatpush2.msra.mxu0 0.0
    %926 = vmatprep.subr.mxu0 0.0
    %927 = vmatpush2.msra.mxu0 0.0
    %928 = vmatprep.subr.mxu0 0.0
    %929 = vmatpush2.msra.mxu0 0.0
    %930 = vmatprep.subr.mxu0 0.0
    %931 = vmatpush2.msra.mxu0 0.0
    %932 = vmatprep.subr.mxu0 0.0
    %933 = vmatpush2.msra.mxu0 0.0
    %934 = vmatprep.subr.mxu0 0.0
    %935 = vmatpush2.msra.mxu0 0.0
    %936 = vmatprep.subr.mxu0 0.0
    %937 = vmatpush2.msra.mxu0 0.0
    %938 = vmatprep.subr.mxu0 0.0
    %939 = vmatpush2.msra.mxu0 0.0
    %940 = vmatprep.mubr.f32.mxu0 0.0
    %941 = vmatmul.mubr.f32.gmra.mxu0 %v870
    %v942 = vpop.f32.mrf.mxu0
    %v943 = vadd.f32 0.0, %v942
    %v944 = vpop.f32.mrf.mxu0
    %v945 = vadd.f32 0.0, %v944
    %946 = vdwg.mxu0
    %947 = vmatprep.subr.mxu0 %v326
    %948 = vmatpush1.msra.mxu0 %v325
    %949 = vmatprep.subr.mxu0 %v322
    %950 = vmatpush1.msra.mxu0 %v321
    %951 = vmatprep.subr.mxu0 %v318
    %952 = vmatpush1.msra.mxu0 %v317
    %953 = vmatprep.subr.mxu0 %v314
    %954 = vmatpush1.msra.mxu0 %v313
    %955 = vmatprep.subr.mxu0 %v310
    %956 = vmatpush1.msra.mxu0 %v309
    %957 = vmatprep.subr.mxu0 %v306
    %958 = vmatpush1.msra.mxu0 %v305
    %959 = vmatprep.subr.mxu0 %v302
    %960 = vmatpush1.msra.mxu0 %v301
    %961 = vmatprep.subr.mxu0 %v298
    %962 = vmatpush1.msra.mxu0 %v297
    %963 = vmatprep.subr.mxu0 %v294
    %964 = vmatpush1.msra.mxu0 %v293
    %965 = vmatprep.subr.mxu0 %v290
    %966 = vmatpush1.msra.mxu0 %v289
    %967 = vmatprep.subr.mxu0 %v286
    %968 = vmatpush1.msra.mxu0 %v285
    %969 = vmatprep.subr.mxu0 %v282
    %970 = vmatpush1.msra.mxu0 %v281
    %971 = vmatprep.subr.mxu0 %v278
    %972 = vmatpush1.msra.mxu0 %v277
    %973 = vmatprep.subr.mxu0 %v274
    %974 = vmatpush1.msra.mxu0 %v273
    %975 = vmatprep.subr.mxu0 %v270
    %976 = vmatpush1.msra.mxu0 %v269
    %977 = vmatprep.subr.mxu0 %v266
    %978 = vmatpush1.msra.mxu0 %v265
    %979 = vmatprep.subr.mxu0 0.0
    %980 = vmatpush2.msra.mxu0 0.0
    %981 = vmatprep.subr.mxu0 0.0
    %982 = vmatpush2.msra.mxu0 0.0
    %983 = vmatprep.subr.mxu0 0.0
    %984 = vmatpush2.msra.mxu0 0.0
    %985 = vmatprep.subr.mxu0 0.0
    %986 = vmatpush2.msra.mxu0 0.0
    %987 = vmatprep.subr.mxu0 0.0
    %988 = vmatpush2.msra.mxu0 0.0
    %989 = vmatprep.subr.mxu0 0.0
    %990 = vmatpush2.msra.mxu0 0.0
    %991 = vmatprep.subr.mxu0 0.0
    %992 = vmatpush2.msra.mxu0 0.0
    %993 = vmatprep.subr.mxu0 0.0
    %994 = vmatpush2.msra.mxu0 0.0
    %995 = vmatprep.subr.mxu0 0.0
    %996 = vmatpush2.msra.mxu0 0.0
    %997 = vmatprep.subr.mxu0 0.0
    %998 = vmatpush2.msra.mxu0 0.0
    %999 = vmatprep.subr.mxu0 0.0
    %1000 = vmatpush2.msra.mxu0 0.0
    %1001 = vmatprep.subr.mxu0 0.0
    %1002 = vmatpush2.msra.mxu0 0.0
    %1003 = vmatprep.subr.mxu0 0.0
    %1004 = vmatpush2.msra.mxu0 0.0
    %1005 = vmatprep.subr.mxu0 0.0
    %1006 = vmatpush2.msra.mxu0 0.0
    %1007 = vmatprep.subr.mxu0 0.0
    %1008 = vmatpush2.msra.mxu0 0.0
    %1009 = vmatprep.subr.mxu0 0.0
    %1010 = vmatpush2.msra.mxu0 0.0
    %1011 = vmatprep.mubr.f32.mxu0 0.0
    %1012 = vmatmul.mubr.f32.gmra.mxu0 %v870
    %v1013 = vpop.f32.mrf.mxu0
    %v1014 = vadd.f32 0.0, %v1013
    %v1015 = vpop.f32.mrf.mxu0
    %v1016 = vadd.f32 0.0, %v1015
    %1017 = vdwg.mxu0
    %v1018 = vadd.f32 %v872, %v943
    %v1019 = vadd.f32 %v873, %v945
    %v1020 = vadd.f32 %v874, %v1014
    %v1021 = vadd.f32 %v875, %v1016
    %v1022 = vxor.u32 %v1018, 2147483648
    %v1023 = vmul.f32 %v1022, 1.442695
    %v1024 = vpow.pop %v1023
    %v1025 = vadd.f32 %v1024, 1.0
    %v1026 = vrcp.pop %v1025
    %v1027 = vmul.f32 1.0, %v1026
    %v1028 = vxor.u32 %v1019, 2147483648
    %v1029 = vmul.f32 %v1028, 1.442695
    %v1030 = vpow.pop %v1029
    %v1031 = vadd.f32 %v1030, 1.0
    %v1032 = vrcp.pop %v1031
    %v1033 = vmul.f32 1.0, %v1032
    %v1034 = vmax.f32 %v1020, 0.0
    %v1035 = vxor.u32 %v1021, 2147483648
    %v1036 = vmul.f32 %v1035, 1.442695
    %v1037 = vpow.pop %v1036
    %v1038 = vadd.f32 %v1037, 1.0
    %v1039 = vrcp.pop %v1038
    %v1040 = vmul.f32 1.0, %v1039
    %v1041 = vmul.f32 %v1033, %v868
    %v1042 = vmul.f32 %v1027, %v1034
    %v1043 = vadd.f32 %v1041, %v1042
    %v1044 = vmax.f32 %v1043, 0.0
    %v1045 = vmul.f32 %v1040, %v1044
    %s1046 = scalar_lea.vmem [#allocation2], 160
    %v1047 = vld [vmem:[%s1046] sm:$0xff]
    %v1048 = vld [vmem:[%s1046 + $0x8] sm:$0xff]
    %v1049 = vld [vmem:[%s1046 + $0x10] sm:$0xff]
    %v1050 = vld [vmem:[%s1046 + $0x18] sm:$0xff]
    %1051 = vmatprep.subr.mxu0 %v324
    %1052 = vmatpush1.msra.mxu0 %v323
    %1053 = vmatprep.subr.mxu0 %v320
    %1054 = vmatpush1.msra.mxu0 %v319
    %1055 = vmatprep.subr.mxu0 %v316
    %1056 = vmatpush1.msra.mxu0 %v315
    %1057 = vmatprep.subr.mxu0 %v312
    %1058 = vmatpush1.msra.mxu0 %v311
    %1059 = vmatprep.subr.mxu0 %v308
    %1060 = vmatpush1.msra.mxu0 %v307
    %1061 = vmatprep.subr.mxu0 %v304
    %1062 = vmatpush1.msra.mxu0 %v303
    %1063 = vmatprep.subr.mxu0 %v300
    %1064 = vmatpush1.msra.mxu0 %v299
    %1065 = vmatprep.subr.mxu0 %v296
    %1066 = vmatpush1.msra.mxu0 %v295
    %1067 = vmatprep.subr.mxu0 %v292
    %1068 = vmatpush1.msra.mxu0 %v291
    %1069 = vmatprep.subr.mxu0 %v288
    %1070 = vmatpush1.msra.mxu0 %v287
    %1071 = vmatprep.subr.mxu0 %v284
    %1072 = vmatpush1.msra.mxu0 %v283
    %1073 = vmatprep.subr.mxu0 %v280
    %1074 = vmatpush1.msra.mxu0 %v279
    %1075 = vmatprep.subr.mxu0 %v276
    %1076 = vmatpush1.msra.mxu0 %v275
    %1077 = vmatprep.subr.mxu0 %v272
    %1078 = vmatpush1.msra.mxu0 %v271
    %1079 = vmatprep.subr.mxu0 %v268
    %1080 = vmatpush1.msra.mxu0 %v267
    %1081 = vmatprep.subr.mxu0 %v264
    %1082 = vmatpush1.msra.mxu0 %v263
    %1083 = vmatprep.subr.mxu0 0.0
    %1084 = vmatpush2.msra.mxu0 0.0
    %1085 = vmatprep.subr.mxu0 0.0
    %1086 = vmatpush2.msra.mxu0 0.0
    %1087 = vmatprep.subr.mxu0 0.0
    %1088 = vmatpush2.msra.mxu0 0.0
    %1089 = vmatprep.subr.mxu0 0.0
    %1090 = vmatpush2.msra.mxu0 0.0
    %1091 = vmatprep.subr.mxu0 0.0
    %1092 = vmatpush2.msra.mxu0 0.0
    %1093 = vmatprep.subr.mxu0 0.0
    %1094 = vmatpush2.msra.mxu0 0.0
    %1095 = vmatprep.subr.mxu0 0.0
    %1096 = vmatpush2.msra.mxu0 0.0
    %1097 = vmatprep.subr.mxu0 0.0
    %1098 = vmatpush2.msra.mxu0 0.0
    %1099 = vmatprep.subr.mxu0 0.0
    %1100 = vmatpush2.msra.mxu0 0.0
    %1101 = vmatprep.subr.mxu0 0.0
    %1102 = vmatpush2.msra.mxu0 0.0
    %1103 = vmatprep.subr.mxu0 0.0
    %1104 = vmatpush2.msra.mxu0 0.0
    %1105 = vmatprep.subr.mxu0 0.0
    %1106 = vmatpush2.msra.mxu0 0.0
    %1107 = vmatprep.subr.mxu0 0.0
    %1108 = vmatpush2.msra.mxu0 0.0
    %1109 = vmatprep.subr.mxu0 0.0
    %1110 = vmatpush2.msra.mxu0 0.0
    %1111 = vmatprep.subr.mxu0 0.0
    %1112 = vmatpush2.msra.mxu0 0.0
    %1113 = vmatprep.subr.mxu0 0.0
    %1114 = vmatpush2.msra.mxu0 0.0
    %1115 = vmatprep.mubr.f32.mxu0 0.0
    %1116 = vmatmul.mubr.f32.gmra.mxu0 %v1045
    %v1117 = vpop.f32.mrf.mxu0
    %v1118 = vadd.f32 0.0, %v1117
    %v1119 = vpop.f32.mrf.mxu0
    %v1120 = vadd.f32 0.0, %v1119
    %1121 = vdwg.mxu0
    %1122 = vmatprep.subr.mxu0 %v326
    %1123 = vmatpush1.msra.mxu0 %v325
    %1124 = vmatprep.subr.mxu0 %v322
    %1125 = vmatpush1.msra.mxu0 %v321
    %1126 = vmatprep.subr.mxu0 %v318
    %1127 = vmatpush1.msra.mxu0 %v317
    %1128 = vmatprep.subr.mxu0 %v314
    %1129 = vmatpush1.msra.mxu0 %v313
    %1130 = vmatprep.subr.mxu0 %v310
    %1131 = vmatpush1.msra.mxu0 %v309
    %1132 = vmatprep.subr.mxu0 %v306
    %1133 = vmatpush1.msra.mxu0 %v305
    %1134 = vmatprep.subr.mxu0 %v302
    %1135 = vmatpush1.msra.mxu0 %v301
    %1136 = vmatprep.subr.mxu0 %v298
    %1137 = vmatpush1.msra.mxu0 %v297
    %1138 = vmatprep.subr.mxu0 %v294
    %1139 = vmatpush1.msra.mxu0 %v293
    %1140 = vmatprep.subr.mxu0 %v290
    %1141 = vmatpush1.msra.mxu0 %v289
    %1142 = vmatprep.subr.mxu0 %v286
    %1143 = vmatpush1.msra.mxu0 %v285
    %1144 = vmatprep.subr.mxu0 %v282
    %1145 = vmatpush1.msra.mxu0 %v281
    %1146 = vmatprep.subr.mxu0 %v278
    %1147 = vmatpush1.msra.mxu0 %v277
    %1148 = vmatprep.subr.mxu0 %v274
    %1149 = vmatpush1.msra.mxu0 %v273
    %1150 = vmatprep.subr.mxu0 %v270
    %1151 = vmatpush1.msra.mxu0 %v269
    %1152 = vmatprep.subr.mxu0 %v266
    %1153 = vmatpush1.msra.mxu0 %v265
    %1154 = vmatprep.subr.mxu0 0.0
    %1155 = vmatpush2.msra.mxu0 0.0
    %1156 = vmatprep.subr.mxu0 0.0
    %1157 = vmatpush2.msra.mxu0 0.0
    %1158 = vmatprep.subr.mxu0 0.0
    %1159 = vmatpush2.msra.mxu0 0.0
    %1160 = vmatprep.subr.mxu0 0.0
    %1161 = vmatpush2.msra.mxu0 0.0
    %1162 = vmatprep.subr.mxu0 0.0
    %1163 = vmatpush2.msra.mxu0 0.0
    %1164 = vmatprep.subr.mxu0 0.0
    %1165 = vmatpush2.msra.mxu0 0.0
    %1166 = vmatprep.subr.mxu0 0.0
    %1167 = vmatpush2.msra.mxu0 0.0
    %1168 = vmatprep.subr.mxu0 0.0
    %1169 = vmatpush2.msra.mxu0 0.0
    %1170 = vmatprep.subr.mxu0 0.0
    %1171 = vmatpush2.msra.mxu0 0.0
    %1172 = vmatprep.subr.mxu0 0.0
    %1173 = vmatpush2.msra.mxu0 0.0
    %1174 = vmatprep.subr.mxu0 0.0
    %1175 = vmatpush2.msra.mxu0 0.0
    %1176 = vmatprep.subr.mxu0 0.0
    %1177 = vmatpush2.msra.mxu0 0.0
    %1178 = vmatprep.subr.mxu0 0.0
    %1179 = vmatpush2.msra.mxu0 0.0
    %1180 = vmatprep.subr.mxu0 0.0
    %1181 = vmatpush2.msra.mxu0 0.0
    %1182 = vmatprep.subr.mxu0 0.0
    %1183 = vmatpush2.msra.mxu0 0.0
    %1184 = vmatprep.subr.mxu0 0.0
    %1185 = vmatpush2.msra.mxu0 0.0
    %1186 = vmatprep.mubr.f32.mxu0 0.0
    %1187 = vmatmul.mubr.f32.gmra.mxu0 %v1045
    %v1188 = vpop.f32.mrf.mxu0
    %v1189 = vadd.f32 0.0, %v1188
    %v1190 = vpop.f32.mrf.mxu0
    %v1191 = vadd.f32 0.0, %v1190
    %1192 = vdwg.mxu0
    %v1193 = vadd.f32 %v1047, %v1118
    %v1194 = vadd.f32 %v1048, %v1120
    %v1195 = vadd.f32 %v1049, %v1189
    %v1196 = vadd.f32 %v1050, %v1191
    %v1197 = vxor.u32 %v1193, 2147483648
    %v1198 = vmul.f32 %v1197, 1.442695
    %v1199 = vpow.pop %v1198
    %v1200 = vadd.f32 %v1199, 1.0
    %v1201 = vrcp.pop %v1200
    %v1202 = vmul.f32 1.0, %v1201
    %v1203 = vxor.u32 %v1194, 2147483648
    %v1204 = vmul.f32 %v1203, 1.442695
    %v1205 = vpow.pop %v1204
    %v1206 = vadd.f32 %v1205, 1.0
    %v1207 = vrcp.pop %v1206
    %v1208 = vmul.f32 1.0, %v1207
    %v1209 = vmax.f32 %v1195, 0.0
    %v1210 = vxor.u32 %v1196, 2147483648
    %v1211 = vmul.f32 %v1210, 1.442695
    %v1212 = vpow.pop %v1211
    %v1213 = vadd.f32 %v1212, 1.0
    %v1214 = vrcp.pop %v1213
    %v1215 = vmul.f32 1.0, %v1214
    %v1216 = vmul.f32 %v1208, %v1043
    %v1217 = vmul.f32 %v1202, %v1209
    %v1218 = vadd.f32 %v1216, %v1217
    %v1219 = vmax.f32 %v1218, 0.0
    %v1220 = vmul.f32 %v1215, %v1219
    %s1221 = scalar_lea.vmem [#allocation2], 192
    %v1222 = vld [vmem:[%s1221] sm:$0xff]
    %v1223 = vld [vmem:[%s1221 + $0x8] sm:$0xff]
    %v1224 = vld [vmem:[%s1221 + $0x10] sm:$0xff]
    %v1225 = vld [vmem:[%s1221 + $0x18] sm:$0xff]
    %1226 = vmatprep.subr.mxu0 %v324
    %1227 = vmatpush1.msra.mxu0 %v323
    %1228 = vmatprep.subr.mxu0 %v320
    %1229 = vmatpush1.msra.mxu0 %v319
    %1230 = vmatprep.subr.mxu0 %v316
    %1231 = vmatpush1.msra.mxu0 %v315
    %1232 = vmatprep.subr.mxu0 %v312
    %1233 = vmatpush1.msra.mxu0 %v311
    %1234 = vmatprep.subr.mxu0 %v308
    %1235 = vmatpush1.msra.mxu0 %v307
    %1236 = vmatprep.subr.mxu0 %v304
    %1237 = vmatpush1.msra.mxu0 %v303
    %1238 = vmatprep.subr.mxu0 %v300
    %1239 = vmatpush1.msra.mxu0 %v299
    %1240 = vmatprep.subr.mxu0 %v296
    %1241 = vmatpush1.msra.mxu0 %v295
    %1242 = vmatprep.subr.mxu0 %v292
    %1243 = vmatpush1.msra.mxu0 %v291
    %1244 = vmatprep.subr.mxu0 %v288
    %1245 = vmatpush1.msra.mxu0 %v287
    %1246 = vmatprep.subr.mxu0 %v284
    %1247 = vmatpush1.msra.mxu0 %v283
    %1248 = vmatprep.subr.mxu0 %v280
    %1249 = vmatpush1.msra.mxu0 %v279
    %1250 = vmatprep.subr.mxu0 %v276
    %1251 = vmatpush1.msra.mxu0 %v275
    %1252 = vmatprep.subr.mxu0 %v272
    %1253 = vmatpush1.msra.mxu0 %v271
    %1254 = vmatprep.subr.mxu0 %v268
    %1255 = vmatpush1.msra.mxu0 %v267
    %1256 = vmatprep.subr.mxu0 %v264
    %1257 = vmatpush1.msra.mxu0 %v263
    %1258 = vmatprep.subr.mxu0 0.0
    %1259 = vmatpush2.msra.mxu0 0.0
    %1260 = vmatprep.subr.mxu0 0.0
    %1261 = vmatpush2.msra.mxu0 0.0
    %1262 = vmatprep.subr.mxu0 0.0
    %1263 = vmatpush2.msra.mxu0 0.0
    %1264 = vmatprep.subr.mxu0 0.0
    %1265 = vmatpush2.msra.mxu0 0.0
    %1266 = vmatprep.subr.mxu0 0.0
    %1267 = vmatpush2.msra.mxu0 0.0
    %1268 = vmatprep.subr.mxu0 0.0
    %1269 = vmatpush2.msra.mxu0 0.0
    %1270 = vmatprep.subr.mxu0 0.0
    %1271 = vmatpush2.msra.mxu0 0.0
    %1272 = vmatprep.subr.mxu0 0.0
    %1273 = vmatpush2.msra.mxu0 0.0
    %1274 = vmatprep.subr.mxu0 0.0
    %1275 = vmatpush2.msra.mxu0 0.0
    %1276 = vmatprep.subr.mxu0 0.0
    %1277 = vmatpush2.msra.mxu0 0.0
    %1278 = vmatprep.subr.mxu0 0.0
    %1279 = vmatpush2.msra.mxu0 0.0
    %1280 = vmatprep.subr.mxu0 0.0
    %1281 = vmatpush2.msra.mxu0 0.0
    %1282 = vmatprep.subr.mxu0 0.0
    %1283 = vmatpush2.msra.mxu0 0.0
    %1284 = vmatprep.subr.mxu0 0.0
    %1285 = vmatpush2.msra.mxu0 0.0
    %1286 = vmatprep.subr.mxu0 0.0
    %1287 = vmatpush2.msra.mxu0 0.0
    %1288 = vmatprep.subr.mxu0 0.0
    %1289 = vmatpush2.msra.mxu0 0.0
    %1290 = vmatprep.mubr.f32.mxu0 0.0
    %1291 = vmatmul.mubr.f32.gmra.mxu0 %v1220
    %v1292 = vpop.f32.mrf.mxu0
    %v1293 = vadd.f32 0.0, %v1292
    %v1294 = vpop.f32.mrf.mxu0
    %v1295 = vadd.f32 0.0, %v1294
    %1296 = vdwg.mxu0
    %1297 = vmatprep.subr.mxu0 %v326
    %1298 = vmatpush1.msra.mxu0 %v325
    %1299 = vmatprep.subr.mxu0 %v322
    %1300 = vmatpush1.msra.mxu0 %v321
    %1301 = vmatprep.subr.mxu0 %v318
    %1302 = vmatpush1.msra.mxu0 %v317
    %1303 = vmatprep.subr.mxu0 %v314
    %1304 = vmatpush1.msra.mxu0 %v313
    %1305 = vmatprep.subr.mxu0 %v310
    %1306 = vmatpush1.msra.mxu0 %v309
    %1307 = vmatprep.subr.mxu0 %v306
    %1308 = vmatpush1.msra.mxu0 %v305
    %1309 = vmatprep.subr.mxu0 %v302
    %1310 = vmatpush1.msra.mxu0 %v301
    %1311 = vmatprep.subr.mxu0 %v298
    %1312 = vmatpush1.msra.mxu0 %v297
    %1313 = vmatprep.subr.mxu0 %v294
    %1314 = vmatpush1.msra.mxu0 %v293
    %1315 = vmatprep.subr.mxu0 %v290
    %1316 = vmatpush1.msra.mxu0 %v289
    %1317 = vmatprep.subr.mxu0 %v286
    %1318 = vmatpush1.msra.mxu0 %v285
    %1319 = vmatprep.subr.mxu0 %v282
    %1320 = vmatpush1.msra.mxu0 %v281
    %1321 = vmatprep.subr.mxu0 %v278
    %1322 = vmatpush1.msra.mxu0 %v277
    %1323 = vmatprep.subr.mxu0 %v274
    %1324 = vmatpush1.msra.mxu0 %v273
    %1325 = vmatprep.subr.mxu0 %v270
    %1326 = vmatpush1.msra.mxu0 %v269
    %1327 = vmatprep.subr.mxu0 %v266
    %1328 = vmatpush1.msra.mxu0 %v265
    %1329 = vmatprep.subr.mxu0 0.0
    %1330 = vmatpush2.msra.mxu0 0.0
    %1331 = vmatprep.subr.mxu0 0.0
    %1332 = vmatpush2.msra.mxu0 0.0
    %1333 = vmatprep.subr.mxu0 0.0
    %1334 = vmatpush2.msra.mxu0 0.0
    %1335 = vmatprep.subr.mxu0 0.0
    %1336 = vmatpush2.msra.mxu0 0.0
    %1337 = vmatprep.subr.mxu0 0.0
    %1338 = vmatpush2.msra.mxu0 0.0
    %1339 = vmatprep.subr.mxu0 0.0
    %1340 = vmatpush2.msra.mxu0 0.0
    %1341 = vmatprep.subr.mxu0 0.0
    %1342 = vmatpush2.msra.mxu0 0.0
    %1343 = vmatprep.subr.mxu0 0.0
    %1344 = vmatpush2.msra.mxu0 0.0
    %1345 = vmatprep.subr.mxu0 0.0
    %1346 = vmatpush2.msra.mxu0 0.0
    %1347 = vmatprep.subr.mxu0 0.0
    %1348 = vmatpush2.msra.mxu0 0.0
    %1349 = vmatprep.subr.mxu0 0.0
    %1350 = vmatpush2.msra.mxu0 0.0
    %1351 = vmatprep.subr.mxu0 0.0
    %1352 = vmatpush2.msra.mxu0 0.0
    %1353 = vmatprep.subr.mxu0 0.0
    %1354 = vmatpush2.msra.mxu0 0.0
    %1355 = vmatprep.subr.mxu0 0.0
    %1356 = vmatpush2.msra.mxu0 0.0
    %1357 = vmatprep.subr.mxu0 0.0
    %1358 = vmatpush2.msra.mxu0 0.0
    %1359 = vmatprep.subr.mxu0 0.0
    %1360 = vmatpush2.msra.mxu0 0.0
    %1361 = vmatprep.mubr.f32.mxu0 0.0
    %1362 = vmatmul.mubr.f32.gmra.mxu0 %v1220
    %v1363 = vpop.f32.mrf.mxu0
    %v1364 = vadd.f32 0.0, %v1363
    %v1365 = vpop.f32.mrf.mxu0
    %v1366 = vadd.f32 0.0, %v1365
    %1367 = vdwg.mxu0
    %v1368 = vadd.f32 %v1222, %v1293
    %v1369 = vadd.f32 %v1223, %v1295
    %v1370 = vadd.f32 %v1224, %v1364
    %v1371 = vadd.f32 %v1225, %v1366
    %v1372 = vxor.u32 %v1368, 2147483648
    %v1373 = vmul.f32 %v1372, 1.442695
    %v1374 = vpow.pop %v1373
    %v1375 = vadd.f32 %v1374, 1.0
    %v1376 = vrcp.pop %v1375
    %v1377 = vmul.f32 1.0, %v1376
    %v1378 = vxor.u32 %v1369, 2147483648
    %v1379 = vmul.f32 %v1378, 1.442695
    %v1380 = vpow.pop %v1379
    %v1381 = vadd.f32 %v1380, 1.0
    %v1382 = vrcp.pop %v1381
    %v1383 = vmul.f32 1.0, %v1382
    %v1384 = vmax.f32 %v1370, 0.0
    %v1385 = vxor.u32 %v1371, 2147483648
    %v1386 = vmul.f32 %v1385, 1.442695
    %v1387 = vpow.pop %v1386
    %v1388 = vadd.f32 %v1387, 1.0
    %v1389 = vrcp.pop %v1388
    %v1390 = vmul.f32 1.0, %v1389
    %v1391 = vmul.f32 %v1383, %v1218
    %v1392 = vmul.f32 %v1377, %v1384
    %v1393 = vadd.f32 %v1391, %v1392
    %v1394 = vmax.f32 %v1393, 0.0
    %v1395 = vmul.f32 %v1390, %v1394
    %s1396 = scalar_lea.vmem [#allocation2], 224
    %v1397 = vld [vmem:[%s1396] sm:$0xff]
    %v1398 = vld [vmem:[%s1396 + $0x8] sm:$0xff]
    %v1399 = vld [vmem:[%s1396 + $0x10] sm:$0xff]
    %v1400 = vld [vmem:[%s1396 + $0x18] sm:$0xff]
    %1401 = vmatprep.subr.mxu0 %v324
    %1402 = vmatpush1.msra.mxu0 %v323
    %1403 = vmatprep.subr.mxu0 %v320
    %1404 = vmatpush1.msra.mxu0 %v319
    %1405 = vmatprep.subr.mxu0 %v316
    %1406 = vmatpush1.msra.mxu0 %v315
    %1407 = vmatprep.subr.mxu0 %v312
    %1408 = vmatpush1.msra.mxu0 %v311
    %1409 = vmatprep.subr.mxu0 %v308
    %1410 = vmatpush1.msra.mxu0 %v307
    %1411 = vmatprep.subr.mxu0 %v304
    %1412 = vmatpush1.msra.mxu0 %v303
    %1413 = vmatprep.subr.mxu0 %v300
    %1414 = vmatpush1.msra.mxu0 %v299
    %1415 = vmatprep.subr.mxu0 %v296
    %1416 = vmatpush1.msra.mxu0 %v295
    %1417 = vmatprep.subr.mxu0 %v292
    %1418 = vmatpush1.msra.mxu0 %v291
    %1419 = vmatprep.subr.mxu0 %v288
    %1420 = vmatpush1.msra.mxu0 %v287
    %1421 = vmatprep.subr.mxu0 %v284
    %1422 = vmatpush1.msra.mxu0 %v283
    %1423 = vmatprep.subr.mxu0 %v280
    %1424 = vmatpush1.msra.mxu0 %v279
    %1425 = vmatprep.subr.mxu0 %v276
    %1426 = vmatpush1.msra.mxu0 %v275
    %1427 = vmatprep.subr.mxu0 %v272
    %1428 = vmatpush1.msra.mxu0 %v271
    %1429 = vmatprep.subr.mxu0 %v268
    %1430 = vmatpush1.msra.mxu0 %v267
    %1431 = vmatprep.subr.mxu0 %v264
    %1432 = vmatpush1.msra.mxu0 %v263
    %1433 = vmatprep.subr.mxu0 0.0
    %1434 = vmatpush2.msra.mxu0 0.0
    %1435 = vmatprep.subr.mxu0 0.0
    %1436 = vmatpush2.msra.mxu0 0.0
    %1437 = vmatprep.subr.mxu0 0.0
    %1438 = vmatpush2.msra.mxu0 0.0
    %1439 = vmatprep.subr.mxu0 0.0
    %1440 = vmatpush2.msra.mxu0 0.0
    %1441 = vmatprep.subr.mxu0 0.0
    %1442 = vmatpush2.msra.mxu0 0.0
    %1443 = vmatprep.subr.mxu0 0.0
    %1444 = vmatpush2.msra.mxu0 0.0
    %1445 = vmatprep.subr.mxu0 0.0
    %1446 = vmatpush2.msra.mxu0 0.0
    %1447 = vmatprep.subr.mxu0 0.0
    %1448 = vmatpush2.msra.mxu0 0.0
    %1449 = vmatprep.subr.mxu0 0.0
    %1450 = vmatpush2.msra.mxu0 0.0
    %1451 = vmatprep.subr.mxu0 0.0
    %1452 = vmatpush2.msra.mxu0 0.0
    %1453 = vmatprep.subr.mxu0 0.0
    %1454 = vmatpush2.msra.mxu0 0.0
    %1455 = vmatprep.subr.mxu0 0.0
    %1456 = vmatpush2.msra.mxu0 0.0
    %1457 = vmatprep.subr.mxu0 0.0
    %1458 = vmatpush2.msra.mxu0 0.0
    %1459 = vmatprep.subr.mxu0 0.0
    %1460 = vmatpush2.msra.mxu0 0.0
    %1461 = vmatprep.subr.mxu0 0.0
    %1462 = vmatpush2.msra.mxu0 0.0
    %1463 = vmatprep.subr.mxu0 0.0
    %1464 = vmatpush2.msra.mxu0 0.0
    %1465 = vmatprep.mubr.f32.mxu0 0.0
    %1466 = vmatmul.mubr.f32.gmra.mxu0 %v1395
    %v1467 = vpop.f32.mrf.mxu0
    %v1468 = vadd.f32 0.0, %v1467
    %v1469 = vpop.f32.mrf.mxu0
    %v1470 = vadd.f32 0.0, %v1469
    %1471 = vdwg.mxu0
    %1472 = vmatprep.subr.mxu0 %v326
    %1473 = vmatpush1.msra.mxu0 %v325
    %1474 = vmatprep.subr.mxu0 %v322
    %1475 = vmatpush1.msra.mxu0 %v321
    %1476 = vmatprep.subr.mxu0 %v318
    %1477 = vmatpush1.msra.mxu0 %v317
    %1478 = vmatprep.subr.mxu0 %v314
    %1479 = vmatpush1.msra.mxu0 %v313
    %1480 = vmatprep.subr.mxu0 %v310
    %1481 = vmatpush1.msra.mxu0 %v309
    %1482 = vmatprep.subr.mxu0 %v306
    %1483 = vmatpush1.msra.mxu0 %v305
    %1484 = vmatprep.subr.mxu0 %v302
    %1485 = vmatpush1.msra.mxu0 %v301
    %1486 = vmatprep.subr.mxu0 %v298
    %1487 = vmatpush1.msra.mxu0 %v297
    %1488 = vmatprep.subr.mxu0 %v294
    %1489 = vmatpush1.msra.mxu0 %v293
    %1490 = vmatprep.subr.mxu0 %v290
    %1491 = vmatpush1.msra.mxu0 %v289
    %1492 = vmatprep.subr.mxu0 %v286
    %1493 = vmatpush1.msra.mxu0 %v285
    %1494 = vmatprep.subr.mxu0 %v282
    %1495 = vmatpush1.msra.mxu0 %v281
    %1496 = vmatprep.subr.mxu0 %v278
    %1497 = vmatpush1.msra.mxu0 %v277
    %1498 = vmatprep.subr.mxu0 %v274
    %1499 = vmatpush1.msra.mxu0 %v273
    %1500 = vmatprep.subr.mxu0 %v270
    %1501 = vmatpush1.msra.mxu0 %v269
    %1502 = vmatprep.subr.mxu0 %v266
    %1503 = vmatpush1.msra.mxu0 %v265
    %1504 = vmatprep.subr.mxu0 0.0
    %1505 = vmatpush2.msra.mxu0 0.0
    %1506 = vmatprep.subr.mxu0 0.0
    %1507 = vmatpush2.msra.mxu0 0.0
    %1508 = vmatprep.subr.mxu0 0.0
    %1509 = vmatpush2.msra.mxu0 0.0
    %1510 = vmatprep.subr.mxu0 0.0
    %1511 = vmatpush2.msra.mxu0 0.0
    %1512 = vmatprep.subr.mxu0 0.0
    %1513 = vmatpush2.msra.mxu0 0.0
    %1514 = vmatprep.subr.mxu0 0.0
    %1515 = vmatpush2.msra.mxu0 0.0
    %1516 = vmatprep.subr.mxu0 0.0
    %1517 = vmatpush2.msra.mxu0 0.0
    %1518 = vmatprep.subr.mxu0 0.0
    %1519 = vmatpush2.msra.mxu0 0.0
    %1520 = vmatprep.subr.mxu0 0.0
    %1521 = vmatpush2.msra.mxu0 0.0
    %1522 = vmatprep.subr.mxu0 0.0
    %1523 = vmatpush2.msra.mxu0 0.0
    %1524 = vmatprep.subr.mxu0 0.0
    %1525 = vmatpush2.msra.mxu0 0.0
    %1526 = vmatprep.subr.mxu0 0.0
    %1527 = vmatpush2.msra.mxu0 0.0
    %1528 = vmatprep.subr.mxu0 0.0
    %1529 = vmatpush2.msra.mxu0 0.0
    %1530 = vmatprep.subr.mxu0 0.0
    %1531 = vmatpush2.msra.mxu0 0.0
    %1532 = vmatprep.subr.mxu0 0.0
    %1533 = vmatpush2.msra.mxu0 0.0
    %1534 = vmatprep.subr.mxu0 0.0
    %1535 = vmatpush2.msra.mxu0 0.0
    %1536 = vmatprep.mubr.f32.mxu0 0.0
    %1537 = vmatmul.mubr.f32.gmra.mxu0 %v1395
    %v1538 = vpop.f32.mrf.mxu0
    %v1539 = vadd.f32 0.0, %v1538
    %v1540 = vpop.f32.mrf.mxu0
    %v1541 = vadd.f32 0.0, %v1540
    %1542 = vdwg.mxu0
    %v1543 = vadd.f32 %v1397, %v1468
    %v1544 = vadd.f32 %v1398, %v1470
    %v1545 = vadd.f32 %v1399, %v1539
    %v1546 = vadd.f32 %v1400, %v1541
    %v1547 = vxor.u32 %v1543, 2147483648
    %v1548 = vmul.f32 %v1547, 1.442695
    %v1549 = vpow.pop %v1548
    %v1550 = vadd.f32 %v1549, 1.0
    %v1551 = vrcp.pop %v1550
    %v1552 = vmul.f32 1.0, %v1551
    %v1553 = vxor.u32 %v1544, 2147483648
    %v1554 = vmul.f32 %v1553, 1.442695
    %v1555 = vpow.pop %v1554
    %v1556 = vadd.f32 %v1555, 1.0
    %v1557 = vrcp.pop %v1556
    %v1558 = vmul.f32 1.0, %v1557
    %v1559 = vmax.f32 %v1545, 0.0
    %v1560 = vxor.u32 %v1546, 2147483648
    %v1561 = vmul.f32 %v1560, 1.442695
    %v1562 = vpow.pop %v1561
    %v1563 = vadd.f32 %v1562, 1.0
    %v1564 = vrcp.pop %v1563
    %v1565 = vmul.f32 1.0, %v1564
    %v1566 = vmul.f32 %v1558, %v1393
    %v1567 = vmul.f32 %v1552, %v1559
    %v1568 = vadd.f32 %v1566, %v1567
    %v1569 = vmax.f32 %v1568, 0.0
    %v1570 = vmul.f32 %v1565, %v1569
    %s1571 = scalar_lea.vmem [#allocation2], 256
    %v1572 = vld [vmem:[%s1571] sm:$0xff]
    %v1573 = vld [vmem:[%s1571 + $0x8] sm:$0xff]
    %v1574 = vld [vmem:[%s1571 + $0x10] sm:$0xff]
    %v1575 = vld [vmem:[%s1571 + $0x18] sm:$0xff]
    %1576 = vmatprep.subr.mxu0 %v324
    %1577 = vmatpush1.msra.mxu0 %v323
    %1578 = vmatprep.subr.mxu0 %v320
    %1579 = vmatpush1.msra.mxu0 %v319
    %1580 = vmatprep.subr.mxu0 %v316
    %1581 = vmatpush1.msra.mxu0 %v315
    %1582 = vmatprep.subr.mxu0 %v312
    %1583 = vmatpush1.msra.mxu0 %v311
    %1584 = vmatprep.subr.mxu0 %v308
    %1585 = vmatpush1.msra.mxu0 %v307
    %1586 = vmatprep.subr.mxu0 %v304
    %1587 = vmatpush1.msra.mxu0 %v303
    %1588 = vmatprep.subr.mxu0 %v300
    %1589 = vmatpush1.msra.mxu0 %v299
    %1590 = vmatprep.subr.mxu0 %v296
    %1591 = vmatpush1.msra.mxu0 %v295
    %1592 = vmatprep.subr.mxu0 %v292
    %1593 = vmatpush1.msra.mxu0 %v291
    %1594 = vmatprep.subr.mxu0 %v288
    %1595 = vmatpush1.msra.mxu0 %v287
    %1596 = vmatprep.subr.mxu0 %v284
    %1597 = vmatpush1.msra.mxu0 %v283
    %1598 = vmatprep.subr.mxu0 %v280
    %1599 = vmatpush1.msra.mxu0 %v279
    %1600 = vmatprep.subr.mxu0 %v276
    %1601 = vmatpush1.msra.mxu0 %v275
    %1602 = vmatprep.subr.mxu0 %v272
    %1603 = vmatpush1.msra.mxu0 %v271
    %1604 = vmatprep.subr.mxu0 %v268
    %1605 = vmatpush1.msra.mxu0 %v267
    %1606 = vmatprep.subr.mxu0 %v264
    %1607 = vmatpush1.msra.mxu0 %v263
    %1608 = vmatprep.subr.mxu0 0.0
    %1609 = vmatpush2.msra.mxu0 0.0
    %1610 = vmatprep.subr.mxu0 0.0
    %1611 = vmatpush2.msra.mxu0 0.0
    %1612 = vmatprep.subr.mxu0 0.0
    %1613 = vmatpush2.msra.mxu0 0.0
    %1614 = vmatprep.subr.mxu0 0.0
    %1615 = vmatpush2.msra.mxu0 0.0
    %1616 = vmatprep.subr.mxu0 0.0
    %1617 = vmatpush2.msra.mxu0 0.0
    %1618 = vmatprep.subr.mxu0 0.0
    %1619 = vmatpush2.msra.mxu0 0.0
    %1620 = vmatprep.subr.mxu0 0.0
    %1621 = vmatpush2.msra.mxu0 0.0
    %1622 = vmatprep.subr.mxu0 0.0
    %1623 = vmatpush2.msra.mxu0 0.0
    %1624 = vmatprep.subr.mxu0 0.0
    %1625 = vmatpush2.msra.mxu0 0.0
    %1626 = vmatprep.subr.mxu0 0.0
    %1627 = vmatpush2.msra.mxu0 0.0
    %1628 = vmatprep.subr.mxu0 0.0
    %1629 = vmatpush2.msra.mxu0 0.0
    %1630 = vmatprep.subr.mxu0 0.0
    %1631 = vmatpush2.msra.mxu0 0.0
    %1632 = vmatprep.subr.mxu0 0.0
    %1633 = vmatpush2.msra.mxu0 0.0
    %1634 = vmatprep.subr.mxu0 0.0
    %1635 = vmatpush2.msra.mxu0 0.0
    %1636 = vmatprep.subr.mxu0 0.0
    %1637 = vmatpush2.msra.mxu0 0.0
    %1638 = vmatprep.subr.mxu0 0.0
    %1639 = vmatpush2.msra.mxu0 0.0
    %1640 = vmatprep.mubr.f32.mxu0 0.0
    %1641 = vmatmul.mubr.f32.gmra.mxu0 %v1570
    %v1642 = vpop.f32.mrf.mxu0
    %v1643 = vadd.f32 0.0, %v1642
    %v1644 = vpop.f32.mrf.mxu0
    %v1645 = vadd.f32 0.0, %v1644
    %1646 = vdwg.mxu0
    %1647 = vmatprep.subr.mxu0 %v326
    %1648 = vmatpush1.msra.mxu0 %v325
    %1649 = vmatprep.subr.mxu0 %v322
    %1650 = vmatpush1.msra.mxu0 %v321
    %1651 = vmatprep.subr.mxu0 %v318
    %1652 = vmatpush1.msra.mxu0 %v317
    %1653 = vmatprep.subr.mxu0 %v314
    %1654 = vmatpush1.msra.mxu0 %v313
    %1655 = vmatprep.subr.mxu0 %v310
    %1656 = vmatpush1.msra.mxu0 %v309
    %1657 = vmatprep.subr.mxu0 %v306
    %1658 = vmatpush1.msra.mxu0 %v305
    %1659 = vmatprep.subr.mxu0 %v302
    %1660 = vmatpush1.msra.mxu0 %v301
    %1661 = vmatprep.subr.mxu0 %v298
    %1662 = vmatpush1.msra.mxu0 %v297
    %1663 = vmatprep.subr.mxu0 %v294
    %1664 = vmatpush1.msra.mxu0 %v293
    %1665 = vmatprep.subr.mxu0 %v290
    %1666 = vmatpush1.msra.mxu0 %v289
    %1667 = vmatprep.subr.mxu0 %v286
    %1668 = vmatpush1.msra.mxu0 %v285
    %1669 = vmatprep.subr.mxu0 %v282
    %1670 = vmatpush1.msra.mxu0 %v281
    %1671 = vmatprep.subr.mxu0 %v278
    %1672 = vmatpush1.msra.mxu0 %v277
    %1673 = vmatprep.subr.mxu0 %v274
    %1674 = vmatpush1.msra.mxu0 %v273
    %1675 = vmatprep.subr.mxu0 %v270
    %1676 = vmatpush1.msra.mxu0 %v269
    %1677 = vmatprep.subr.mxu0 %v266
    %1678 = vmatpush1.msra.mxu0 %v265
    %1679 = vmatprep.subr.mxu0 0.0
    %1680 = vmatpush2.msra.mxu0 0.0
    %1681 = vmatprep.subr.mxu0 0.0
    %1682 = vmatpush2.msra.mxu0 0.0
    %1683 = vmatprep.subr.mxu0 0.0
    %1684 = vmatpush2.msra.mxu0 0.0
    %1685 = vmatprep.subr.mxu0 0.0
    %1686 = vmatpush2.msra.mxu0 0.0
    %1687 = vmatprep.subr.mxu0 0.0
    %1688 = vmatpush2.msra.mxu0 0.0
    %1689 = vmatprep.subr.mxu0 0.0
    %1690 = vmatpush2.msra.mxu0 0.0
    %1691 = vmatprep.subr.mxu0 0.0
    %1692 = vmatpush2.msra.mxu0 0.0
    %1693 = vmatprep.subr.mxu0 0.0
    %1694 = vmatpush2.msra.mxu0 0.0
    %1695 = vmatprep.subr.mxu0 0.0
    %1696 = vmatpush2.msra.mxu0 0.0
    %1697 = vmatprep.subr.mxu0 0.0
    %1698 = vmatpush2.msra.mxu0 0.0
    %1699 = vmatprep.subr.mxu0 0.0
    %1700 = vmatpush2.msra.mxu0 0.0
    %1701 = vmatprep.subr.mxu0 0.0
    %1702 = vmatpush2.msra.mxu0 0.0
    %1703 = vmatprep.subr.mxu0 0.0
    %1704 = vmatpush2.msra.mxu0 0.0
    %1705 = vmatprep.subr.mxu0 0.0
    %1706 = vmatpush2.msra.mxu0 0.0
    %1707 = vmatprep.subr.mxu0 0.0
    %1708 = vmatpush2.msra.mxu0 0.0
    %1709 = vmatprep.subr.mxu0 0.0
    %1710 = vmatpush2.msra.mxu0 0.0
    %1711 = vmatprep.mubr.f32.mxu0 0.0
    %1712 = vmatmul.mubr.f32.gmra.mxu0 %v1570
    %v1713 = vpop.f32.mrf.mxu0
    %v1714 = vadd.f32 0.0, %v1713
    %v1715 = vpop.f32.mrf.mxu0
    %v1716 = vadd.f32 0.0, %v1715
    %1717 = vdwg.mxu0
    %v1718 = vadd.f32 %v1572, %v1643
    %v1719 = vadd.f32 %v1573, %v1645
    %v1720 = vadd.f32 %v1574, %v1714
    %v1721 = vadd.f32 %v1575, %v1716
    %v1722 = vxor.u32 %v1718, 2147483648
    %v1723 = vmul.f32 %v1722, 1.442695
    %v1724 = vpow.pop %v1723
    %v1725 = vadd.f32 %v1724, 1.0
    %v1726 = vrcp.pop %v1725
    %v1727 = vmul.f32 1.0, %v1726
    %v1728 = vxor.u32 %v1719, 2147483648
    %v1729 = vmul.f32 %v1728, 1.442695
    %v1730 = vpow.pop %v1729
    %v1731 = vadd.f32 %v1730, 1.0
    %v1732 = vrcp.pop %v1731
    %v1733 = vmul.f32 1.0, %v1732
    %v1734 = vmax.f32 %v1720, 0.0
    %v1735 = vxor.u32 %v1721, 2147483648
    %v1736 = vmul.f32 %v1735, 1.442695
    %v1737 = vpow.pop %v1736
    %v1738 = vadd.f32 %v1737, 1.0
    %v1739 = vrcp.pop %v1738
    %v1740 = vmul.f32 1.0, %v1739
    %v1741 = vmul.f32 %v1733, %v1568
    %v1742 = vmul.f32 %v1727, %v1734
    %v1743 = vadd.f32 %v1741, %v1742
    %v1744 = vmax.f32 %v1743, 0.0
    %v1745 = vmul.f32 %v1740, %v1744
    %s1746 = scalar_lea.vmem [#allocation2], 288
    %v1747 = vld [vmem:[%s1746] sm:$0xff]
    %v1748 = vld [vmem:[%s1746 + $0x8] sm:$0xff]
    %v1749 = vld [vmem:[%s1746 + $0x10] sm:$0xff]
    %v1750 = vld [vmem:[%s1746 + $0x18] sm:$0xff]
    %1751 = vmatprep.subr.mxu0 %v324
    %1752 = vmatpush1.msra.mxu0 %v323
    %1753 = vmatprep.subr.mxu0 %v320
    %1754 = vmatpush1.msra.mxu0 %v319
    %1755 = vmatprep.subr.mxu0 %v316
    %1756 = vmatpush1.msra.mxu0 %v315
    %1757 = vmatprep.subr.mxu0 %v312
    %1758 = vmatpush1.msra.mxu0 %v311
    %1759 = vmatprep.subr.mxu0 %v308
    %1760 = vmatpush1.msra.mxu0 %v307
    %1761 = vmatprep.subr.mxu0 %v304
    %1762 = vmatpush1.msra.mxu0 %v303
    %1763 = vmatprep.subr.mxu0 %v300
    %1764 = vmatpush1.msra.mxu0 %v299
    %1765 = vmatprep.subr.mxu0 %v296
    %1766 = vmatpush1.msra.mxu0 %v295
    %1767 = vmatprep.subr.mxu0 %v292
    %1768 = vmatpush1.msra.mxu0 %v291
    %1769 = vmatprep.subr.mxu0 %v288
    %1770 = vmatpush1.msra.mxu0 %v287
    %1771 = vmatprep.subr.mxu0 %v284
    %1772 = vmatpush1.msra.mxu0 %v283
    %1773 = vmatprep.subr.mxu0 %v280
    %1774 = vmatpush1.msra.mxu0 %v279
    %1775 = vmatprep.subr.mxu0 %v276
    %1776 = vmatpush1.msra.mxu0 %v275
    %1777 = vmatprep.subr.mxu0 %v272
    %1778 = vmatpush1.msra.mxu0 %v271
    %1779 = vmatprep.subr.mxu0 %v268
    %1780 = vmatpush1.msra.mxu0 %v267
    %1781 = vmatprep.subr.mxu0 %v264
    %1782 = vmatpush1.msra.mxu0 %v263
    %1783 = vmatprep.subr.mxu0 0.0
    %1784 = vmatpush2.msra.mxu0 0.0
    %1785 = vmatprep.subr.mxu0 0.0
    %1786 = vmatpush2.msra.mxu0 0.0
    %1787 = vmatprep.subr.mxu0 0.0
    %1788 = vmatpush2.msra.mxu0 0.0
    %1789 = vmatprep.subr.mxu0 0.0
    %1790 = vmatpush2.msra.mxu0 0.0
    %1791 = vmatprep.subr.mxu0 0.0
    %1792 = vmatpush2.msra.mxu0 0.0
    %1793 = vmatprep.subr.mxu0 0.0
    %1794 = vmatpush2.msra.mxu0 0.0
    %1795 = vmatprep.subr.mxu0 0.0
    %1796 = vmatpush2.msra.mxu0 0.0
    %1797 = vmatprep.subr.mxu0 0.0
    %1798 = vmatpush2.msra.mxu0 0.0
    %1799 = vmatprep.subr.mxu0 0.0
    %1800 = vmatpush2.msra.mxu0 0.0
    %1801 = vmatprep.subr.mxu0 0.0
    %1802 = vmatpush2.msra.mxu0 0.0
    %1803 = vmatprep.subr.mxu0 0.0
    %1804 = vmatpush2.msra.mxu0 0.0
    %1805 = vmatprep.subr.mxu0 0.0
    %1806 = vmatpush2.msra.mxu0 0.0
    %1807 = vmatprep.subr.mxu0 0.0
    %1808 = vmatpush2.msra.mxu0 0.0
    %1809 = vmatprep.subr.mxu0 0.0
    %1810 = vmatpush2.msra.mxu0 0.0
    %1811 = vmatprep.subr.mxu0 0.0
    %1812 = vmatpush2.msra.mxu0 0.0
    %1813 = vmatprep.subr.mxu0 0.0
    %1814 = vmatpush2.msra.mxu0 0.0
    %1815 = vmatprep.mubr.f32.mxu0 0.0
    %1816 = vmatmul.mubr.f32.gmra.mxu0 %v1745
    %v1817 = vpop.f32.mrf.mxu0
    %v1818 = vadd.f32 0.0, %v1817
    %v1819 = vpop.f32.mrf.mxu0
    %v1820 = vadd.f32 0.0, %v1819
    %1821 = vdwg.mxu0
    %1822 = vmatprep.subr.mxu0 %v326
    %1823 = vmatpush1.msra.mxu0 %v325
    %1824 = vmatprep.subr.mxu0 %v322
    %1825 = vmatpush1.msra.mxu0 %v321
    %1826 = vmatprep.subr.mxu0 %v318
    %1827 = vmatpush1.msra.mxu0 %v317
    %1828 = vmatprep.subr.mxu0 %v314
    %1829 = vmatpush1.msra.mxu0 %v313
    %1830 = vmatprep.subr.mxu0 %v310
    %1831 = vmatpush1.msra.mxu0 %v309
    %1832 = vmatprep.subr.mxu0 %v306
    %1833 = vmatpush1.msra.mxu0 %v305
    %1834 = vmatprep.subr.mxu0 %v302
    %1835 = vmatpush1.msra.mxu0 %v301
    %1836 = vmatprep.subr.mxu0 %v298
    %1837 = vmatpush1.msra.mxu0 %v297
    %1838 = vmatprep.subr.mxu0 %v294
    %1839 = vmatpush1.msra.mxu0 %v293
    %1840 = vmatprep.subr.mxu0 %v290
    %1841 = vmatpush1.msra.mxu0 %v289
    %1842 = vmatprep.subr.mxu0 %v286
    %1843 = vmatpush1.msra.mxu0 %v285
    %1844 = vmatprep.subr.mxu0 %v282
    %1845 = vmatpush1.msra.mxu0 %v281
    %1846 = vmatprep.subr.mxu0 %v278
    %1847 = vmatpush1.msra.mxu0 %v277
    %1848 = vmatprep.subr.mxu0 %v274
    %1849 = vmatpush1.msra.mxu0 %v273
    %1850 = vmatprep.subr.mxu0 %v270
    %1851 = vmatpush1.msra.mxu0 %v269
    %1852 = vmatprep.subr.mxu0 %v266
    %1853 = vmatpush1.msra.mxu0 %v265
    %1854 = vmatprep.subr.mxu0 0.0
    %1855 = vmatpush2.msra.mxu0 0.0
    %1856 = vmatprep.subr.mxu0 0.0
    %1857 = vmatpush2.msra.mxu0 0.0
    %1858 = vmatprep.subr.mxu0 0.0
    %1859 = vmatpush2.msra.mxu0 0.0
    %1860 = vmatprep.subr.mxu0 0.0
    %1861 = vmatpush2.msra.mxu0 0.0
    %1862 = vmatprep.subr.mxu0 0.0
    %1863 = vmatpush2.msra.mxu0 0.0
    %1864 = vmatprep.subr.mxu0 0.0
    %1865 = vmatpush2.msra.mxu0 0.0
    %1866 = vmatprep.subr.mxu0 0.0
    %1867 = vmatpush2.msra.mxu0 0.0
    %1868 = vmatprep.subr.mxu0 0.0
    %1869 = vmatpush2.msra.mxu0 0.0
    %1870 = vmatprep.subr.mxu0 0.0
    %1871 = vmatpush2.msra.mxu0 0.0
    %1872 = vmatprep.subr.mxu0 0.0
    %1873 = vmatpush2.msra.mxu0 0.0
    %1874 = vmatprep.subr.mxu0 0.0
    %1875 = vmatpush2.msra.mxu0 0.0
    %1876 = vmatprep.subr.mxu0 0.0
    %1877 = vmatpush2.msra.mxu0 0.0
    %1878 = vmatprep.subr.mxu0 0.0
    %1879 = vmatpush2.msra.mxu0 0.0
    %1880 = vmatprep.subr.mxu0 0.0
    %1881 = vmatpush2.msra.mxu0 0.0
    %1882 = vmatprep.subr.mxu0 0.0
    %1883 = vmatpush2.msra.mxu0 0.0
    %1884 = vmatprep.subr.mxu0 0.0
    %1885 = vmatpush2.msra.mxu0 0.0
    %1886 = vmatprep.mubr.f32.mxu0 0.0
    %1887 = vmatmul.mubr.f32.gmra.mxu0 %v1745
    %v1888 = vpop.f32.mrf.mxu0
    %v1889 = vadd.f32 0.0, %v1888
    %v1890 = vpop.f32.mrf.mxu0
    %v1891 = vadd.f32 0.0, %v1890
    %1892 = vdwg.mxu0
    %v1893 = vadd.f32 %v1747, %v1818
    %v1894 = vadd.f32 %v1748, %v1820
    %v1895 = vadd.f32 %v1749, %v1889
    %v1896 = vadd.f32 %v1750, %v1891
    %v1897 = vxor.u32 %v1893, 2147483648
    %v1898 = vmul.f32 %v1897, 1.442695
    %v1899 = vpow.pop %v1898
    %v1900 = vadd.f32 %v1899, 1.0
    %v1901 = vrcp.pop %v1900
    %v1902 = vmul.f32 1.0, %v1901
    %v1903 = vxor.u32 %v1894, 2147483648
    %v1904 = vmul.f32 %v1903, 1.442695
    %v1905 = vpow.pop %v1904
    %v1906 = vadd.f32 %v1905, 1.0
    %v1907 = vrcp.pop %v1906
    %v1908 = vmul.f32 1.0, %v1907
    %v1909 = vmax.f32 %v1895, 0.0
    %v1910 = vxor.u32 %v1896, 2147483648
    %v1911 = vmul.f32 %v1910, 1.442695
    %v1912 = vpow.pop %v1911
    %v1913 = vadd.f32 %v1912, 1.0
    %v1914 = vrcp.pop %v1913
    %v1915 = vmul.f32 1.0, %v1914
    %v1916 = vmul.f32 %v1908, %v1743
    %v1917 = vmul.f32 %v1902, %v1909
    %v1918 = vadd.f32 %v1916, %v1917
    %v1919 = vmax.f32 %v1918, 0.0
    %v1920 = vmul.f32 %v1915, %v1919
    %v1921 = vld [vmem:[%s4] sm:$0x1]
    %v1923 = vlaneseq
    %v1924 = vshrl.u32 %v1923, 7
    %v1925 = vsub.s32 0, %v1924
    %v1926 = vrot.slane %v1921, %v1925
    %v1928 = vmul.f32 %v345, %v1926
    %v1929 = vmul.f32 %v520, %v1926
    %v1930 = vmul.f32 %v695, %v1926
    %v1931 = vmul.f32 %v870, %v1926
    %v1932 = vmul.f32 %v1045, %v1926
    %v1933 = vmul.f32 %v1220, %v1926
    %v1934 = vmul.f32 %v1395, %v1926
    %v1935 = vmul.f32 %v1570, %v1926
    %v1936 = vmul.f32 %v1745, %v1926
    %v1937 = vmul.f32 %v1920, %v1926
    %1938 = vadd.xlane.f32.xlu0 %v1928
    %v1939 = vpop.xlane.xlu0 %1938
    %1940 = vadd.xlane.f32.xlu0 %v1929
    %v1941 = vpop.xlane.xlu0 %1940
    %1942 = vadd.xlane.f32.xlu0 %v1930
    %v1943 = vpop.xlane.xlu0 %1942
    %1944 = vadd.xlane.f32.xlu0 %v1931
    %v1945 = vpop.xlane.xlu0 %1944
    %1946 = vadd.xlane.f32.xlu0 %v1932
    %v1947 = vpop.xlane.xlu0 %1946
    %1948 = vadd.xlane.f32.xlu0 %v1933
    %v1949 = vpop.xlane.xlu0 %1948
    %1950 = vadd.xlane.f32.xlu0 %v1934
    %v1951 = vpop.xlane.xlu0 %1950
    %1952 = vadd.xlane.f32.xlu0 %v1935
    %v1953 = vpop.xlane.xlu0 %1952
    %1954 = vadd.xlane.f32.xlu0 %v1936
    %v1955 = vpop.xlane.xlu0 %1954
    %1956 = vadd.xlane.f32.xlu0 %v1937
    %v1957 = vpop.xlane.xlu0 %1956
    %v1958 = vld [vmem:[#allocation3] sm:$0x1]
    %v1960 = vlaneseq
    %v1961 = vshrl.u32 %v1960, 7
    %v1962 = vsub.s32 0, %v1961
    %v1963 = vrot.slane %v1958, %v1962
    %1964 = vset.pattern.permute.xlu0 0
    %1965 = vperm.xlu0 %1964, %v1963
    %v1966 = vpop.permute.xlu0 %1965
    %v1968 = vadd.f32 %v1939, %v1966
    %v1969 = vadd.f32 %v1941, %v1966
    %v1970 = vadd.f32 %v1943, %v1966
    %v1971 = vadd.f32 %v1945, %v1966
    %v1972 = vadd.f32 %v1947, %v1966
    %v1973 = vadd.f32 %v1949, %v1966
    %v1974 = vadd.f32 %v1951, %v1966
    %v1975 = vadd.f32 %v1953, %v1966
    %v1976 = vadd.f32 %v1955, %v1966
    %v1977 = vadd.f32 %v1957, %v1966
    %v1988 = vlaneseq
    %v1989 = vand.u32 %v1988, 127
    %v1990 = vlaneseq
    %v1991 = vshrl.u32 %v1990, 7
    %v1992 = vsub.s32 %v1989, %v1991
    %v1993 = vrot.slane %v1968, %v1992
    %v1994 = vlaneseq
    %v1995 = vshrl.u32 %v1994, 7
    %v1996 = vsub.s32 %v1989, %v1995
    %v1997 = vrot.slane %v1969, %v1996
    %v1998 = vlaneseq
    %v1999 = vshrl.u32 %v1998, 7
    %v2000 = vsub.s32 %v1989, %v1999
    %v2001 = vrot.slane %v1970, %v2000
    %v2002 = vlaneseq
    %v2003 = vshrl.u32 %v2002, 7
    %v2004 = vsub.s32 %v1989, %v2003
    %v2005 = vrot.slane %v1971, %v2004
    %v2006 = vlaneseq
    %v2007 = vshrl.u32 %v2006, 7
    %v2008 = vsub.s32 %v1989, %v2007
    %v2009 = vrot.slane %v1972, %v2008
    %v2010 = vlaneseq
    %v2011 = vshrl.u32 %v2010, 7
    %v2012 = vsub.s32 %v1989, %v2011
    %v2013 = vrot.slane %v1973, %v2012
    %v2014 = vlaneseq
    %v2015 = vshrl.u32 %v2014, 7
    %v2016 = vsub.s32 %v1989, %v2015
    %v2017 = vrot.slane %v1974, %v2016
    %v2018 = vlaneseq
    %v2019 = vshrl.u32 %v2018, 7
    %v2020 = vsub.s32 %v1989, %v2019
    %v2021 = vrot.slane %v1975, %v2020
    %v2022 = vlaneseq
    %v2023 = vshrl.u32 %v2022, 7
    %v2024 = vsub.s32 %v1989, %v2023
    %v2025 = vrot.slane %v1976, %v2024
    %v2026 = vlaneseq
    %v2027 = vshrl.u32 %v2026, 7
    %v2028 = vsub.s32 %v1989, %v2027
    %v2029 = vrot.slane %v1977, %v2028
    %vm2030 = vcmask 1041409
    %v2031 = vsel %vm2030, %v1997, %v1993
    %vm2032 = vcmask 1042434
    %v2033 = vsel %vm2032, %v2001, %v2031
    %vm2034 = vcmask 1043459
    %v2035 = vsel %vm2034, %v2005, %v2033
    %vm2036 = vcmask 1044484
    %v2037 = vsel %vm2036, %v2009, %v2035
    %vm2038 = vcmask 1045509
    %v2039 = vsel %vm2038, %v2013, %v2037
    %vm2040 = vcmask 1046534
    %v2041 = vsel %vm2040, %v2017, %v2039
    %vm2042 = vcmask 1047559
    %v2043 = vsel %vm2042, %v2021, %v2041
    %v2044 = vsel %vm2030, %v2029, %v2025
    %vm2047 = vcmask 64512
    %2048 = vst.msk [vmem:[%s6] sm:$0xff] %vm2047, %v2043
    %vm2049 = vcmask 58368
    %2050 = vst.msk [vmem:[%s6 + $0x8] sm:$0x3] %vm2049, %v2044
    // Predicated region
    $region30: #{tpu_custom_call.1} parent=1 // pred_check
      _
    $region31: #{tpu_custom_call.1} parent=1 // pred_check_branch
      %2052 = sbr.rel (0) target = $region33
    $region32: #{tpu_custom_call.1} parent=1 // pred_region
      _
    $region33: #{tpu_custom_call.1} parent=1 // pred_fallthru
      _
    // Predicated region
    $region34: #{tpu_custom_call.1} parent=1 // pred_check
      _
    $region35: #{tpu_custom_call.1} parent=1 // pred_check_branch
      %2054 = sbr.rel (0) target = $region37
    $region36: #{tpu_custom_call.1} parent=1 // pred_region
      _
    $region37: #{tpu_custom_call.1} parent=1 // pred_fallthru
      _
    %2055 = vsyncpa [#allocation5], 1

</llo_original>
